<compile_context>
chip_gen: v5e
topology: v5e:2x2
jax: 0.10.0
libtpu: 0.0.40
codegen_flags: <defaults>
</compile_context>

<pallas_src>
import jax
import jax.numpy as jnp
from jax import lax
from jax.experimental import pallas as pl
from jax.experimental.pallas import tpu as pltpu


def mpnn_kernel(ef_ref, hsrc_ref, dst_ref, nft_ref,
                w1_ref, b1_ref, w2_ref, b2_ref,
                r_ref, k_ref, bias_ref, out_ref):
    j = pl.program_id(0)                    # edge tile (reduction axis)
    tE = ef_ref.shape[0]
    n_lanes = out_ref.shape[1]              # N_pad (multiple of 128 -> lane-dense stores)

    # ---- init resident (H, N_pad) accumulator with residual + bias on the first tile ----
    @pl.when(j == 0)
    def _init():
        out_ref[...] = nft_ref[...] + bias_ref[...]

    # ---- edge_func MLP: (tE, De) -> (tE, Dh) -> (tE, H*H); bf16 operands, f32 accumulate ----
    h1 = jnp.dot(ef_ref[...], w1_ref[...], preferred_element_type=jnp.float32) + b1_ref[...]
    h1 = jnp.maximum(h1, 0.0).astype(jnp.bfloat16)
    w_flat = jnp.dot(h1, w2_ref[...], preferred_element_type=jnp.float32) + b2_ref[...]   # (tE, H*H) f32

    # ---- per-edge message on the MXU, no (tE, H, H) reshape ----
    # h_rep[e, i*H+j] = h_src[e, i];  m[e, j] = sum_i h_src[e, i] * w_flat[e, i*H+j]
    # NOTE: the h_src @ R matmul has contraction only H (=32) -> ~12.5% MXU row utilization
    # on v6e/v7x, but it is tiny in absolute terms.  TODO(synk): replace with an H-step VPU
    # accumulate (m += h_src[:, i:i+1] * w_flat[:, i*H:(i+1)*H]) to also drop the (tE, H*H)
    # h_rep temporary.
    h_rep = jnp.dot(hsrc_ref[...], r_ref[...], preferred_element_type=jnp.float32)        # (tE, H*H)
    m = jnp.dot(h_rep * w_flat, k_ref[...], preferred_element_type=jnp.float32)           # (tE, H)

    # ---- scatter-sum into the lane-dense (H, N_pad) resident accumulator ----
    # onehot[e, n] = 1 iff dst[e] == n; padded edges carry dst = -1 and contribute nothing.
    node_iota = lax.broadcasted_iota(jnp.int32, (tE, n_lanes), 1)
    onehot = (dst_ref[...] == node_iota).astype(jnp.float32)                               # (tE, N_pad)
    out_ref[...] += lax.dot_general(
        m, onehot,
        dimension_numbers=(((0,), (0,)), ((), ())),
        preferred_element_type=jnp.float32)                                                # (H, N_pad)


def dgl_mpnn_layer(nf, ef, src, dst, params, *, edge_tile=256, vmem_limit_bytes=None):
    """NNConv(hid, hid, edge_func, 'sum', residual=True) forward via one Pallas kernel."""
    W1, b1, W2, b2, bias = params
    N, H = nf.shape
    E, DE = ef.shape
    DH = W1.shape[1]
    HH = H * H

    # ---- source gather in the wrapper (cheap XLA gather) -> kernel work is O(E), not O(E*N) ----
    # TODO(synk): replace with an in-kernel scalar-prefetch + DMA row gather for huge N.
    h_src = nf[src].astype(jnp.float32)                                    # (E, H)

    # ---- pad edges to a multiple of the edge tile; padded edges get dst=-1 -> dropped ----
    tE = max(8, int(edge_tile))
    E_pad = -(-E // tE) * tE
    if E_pad != E:
        ef = jnp.pad(ef, ((0, E_pad - E), (0, 0)))
        h_src = jnp.pad(h_src, ((0, E_pad - E), (0, 0)))
        dst = jnp.pad(dst, (0, E_pad - E), constant_values=-1)
    dst2 = dst.reshape(E_pad, 1).astype(jnp.int32)

    # ---- pad nodes to a multiple of 128 so the (H, N_pad) accumulator is lane-dense ----
    N_pad = -(-N // 128) * 128
    nf_t = jnp.pad(nf, ((0, N_pad - N), (0, 0))).T.astype(jnp.float32)     # (H, N_pad) residual
    bias_t = bias.reshape(1, H).T.astype(jnp.float32)                      # (H, 1)

    # ---- bf16 operands for the edge-MLP matmuls (kernel accumulates in f32) ----
    ef_b = ef.astype(jnp.bfloat16)
    W1_b = W1.astype(jnp.bfloat16)
    W2_b = W2.astype(jnp.bfloat16)
    b1_f = b1.reshape(1, DH).astype(jnp.float32)
    b2_f = b2.reshape(1, HH).astype(jnp.float32)

    # constant 0/1 expand / reduce matrices that keep the per-edge message on the MXU
    p = jnp.arange(HH)
    R = (p[None, :] // H == jnp.arange(H)[:, None]).astype(jnp.float32)    # (H, H*H)
    K = (p[:, None] % H == jnp.arange(H)[None, :]).astype(jnp.float32)     # (H*H, H)

    grid = (E_pad // tE,)

    # VMEM budget per generation: ~96 MiB on v5e/v6e (128 MiB physical), ~48 MiB on v7x (64 MiB).
    if vmem_limit_bytes is None:
        try:
            cap = pltpu.get_tpu_info().vmem_capacity_bytes
        except Exception:
            cap = 64 * 1024 * 1024          # conservative fallback, valid on all generations
        vmem_limit_bytes = int(min(96 * 1024 * 1024, (cap * 3) // 4))

    full = lambda a: pl.BlockSpec(a.shape, lambda j: (0, 0))
    edge_blk = lambda cols: pl.BlockSpec((tE, cols), lambda j: (j, 0))

    # cost estimate for the single-pass structure (edge MLP + message + scatter), counted once
    flops = 2 * E_pad * (DE * DH + DH * HH + H * HH + HH * H + N_pad * H) + E_pad * HH
    bytes_accessed = (ef_b.size * 2 + W1_b.size * 2 + W2_b.size * 2 +
                      4 * (h_src.size + dst2.size + nf_t.size + b1_f.size + b2_f.size +
                           R.size + K.size + bias_t.size + H * N_pad))

    out = pl.pallas_call(
        mpnn_kernel,
        out_shape=jax.ShapeDtypeStruct((H, N_pad), jnp.float32),
        grid=grid,
        in_specs=[
            edge_blk(DE),          # edge features (bf16), streamed by edge tile
            edge_blk(H),           # gathered source node features (f32), streamed
            edge_blk(1),           # dst indices (int32)
            full(nf_t),            # residual (transposed), VMEM-resident across the grid
            full(W1_b), full(b1_f), full(W2_b), full(b2_f),
            full(R), full(K), full(bias_t),
        ],
        out_specs=pl.BlockSpec((H, N_pad), lambda j: (0, 0)),   # resident lane-dense accumulator
        compiler_params=pltpu.CompilerParams(
            dimension_semantics=("arbitrary",),
            vmem_limit_bytes=vmem_limit_bytes,
        ),
        cost_estimate=pl.CostEstimate(flops=int(flops), transcendentals=0,
                                      bytes_accessed=int(bytes_accessed)),
    )(ef_b, h_src, dst2, nf_t, W1_b, b1_f, W2_b, b2_f, R, K, bias_t)

    return out[:, :N].T                                                    # (N, H)


def reference(nf, ef, src, dst, params):
    """Pure-JAX reference matching DGL NNConv('sum', residual=True, bias=True)."""
    W1, b1, W2, b2, bias = params
    N, H = nf.shape
    E = ef.shape[0]
    h1 = jnp.maximum(ef @ W1 + b1, 0.0)
    w_e = (h1 @ W2 + b2).reshape(E, H, H)
    h_src = nf[src]
    m = jnp.einsum('ei,eij->ej', h_src, w_e)
    agg = jnp.zeros((N, H), jnp.float32).at[dst].add(m)
    return agg + nf + bias


if __name__ == "__main__":
    # Small deterministic shapes
    N = 16          # nodes
    E = 64          # edges
    H = 32          # hid_dim
    DE = 8          # edge feature dim
    DH = 64         # edge_func hidden dim

    key = jax.random.PRNGKey(0)
    k_nf, k_ef, k_src, k_dst, k_w1, k_b1, k_w2, k_b2, k_bias = jax.random.split(key, 9)

    nf = jax.random.normal(k_nf, (N, H), dtype=jnp.float32)
    ef = jax.random.normal(k_ef, (E, DE), dtype=jnp.float32)
    src = jax.random.randint(k_src, (E,), 0, N)
    dst = jax.random.randint(k_dst, (E,), 0, N)

    # Deterministic parameter init (edge_func MLP + NNConv bias); biases kept 2-D for TPU layout.
    W1 = 0.1 * jax.random.normal(k_w1, (DE, DH), dtype=jnp.float32)
    b1 = 0.1 * jax.random.normal(k_b1, (1, DH), dtype=jnp.float32)
    W2 = 0.1 * jax.random.normal(k_w2, (DH, H * H), dtype=jnp.float32)
    b2 = 0.1 * jax.random.normal(k_b2, (1, H * H), dtype=jnp.float32)
    bias = 0.1 * jax.random.normal(k_bias, (1, H), dtype=jnp.float32)
    params = (W1, b1, W2, b2, bias)

    # edge_tile=32 at this toy size so the resident accumulator is exercised across 2 edge
    # tiles; production default is 256 (full MXU rows on v6e/v7x).
    out = dgl_mpnn_layer(nf, ef, src, dst, params, edge_tile=32)
    out = jax.block_until_ready(out)

    ref = reference(nf, ef, src, dst, params)
    assert out.shape == (N, H) and out.dtype == jnp.float32
    err = float(jnp.max(jnp.abs(out - ref)))
    # bf16 edge-MLP matmuls (f32 accumulation) -> slightly looser tolerance than pure f32
    assert jnp.allclose(out, ref, rtol=2e-2, atol=5e-2), err

    print("KERNEL_OK")
</pallas_src>

<mosaic_0001>
module attributes {stable_mosaic.version = 11 : i64} {
  func.func @mpnn_kernel(%arg0: i32, %arg1: memref<32x8xbf16, #tpu.memory_space<vmem>>, %arg2: memref<32x32xf32, #tpu.memory_space<vmem>>, %arg3: memref<32x1xi32, #tpu.memory_space<vmem>>, %arg4: memref<32x128xf32, #tpu.memory_space<vmem>>, %arg5: memref<8x64xbf16, #tpu.memory_space<vmem>>, %arg6: memref<1x64xf32, #tpu.memory_space<vmem>>, %arg7: memref<64x1024xbf16, #tpu.memory_space<vmem>>, %arg8: memref<1x1024xf32, #tpu.memory_space<vmem>>, %arg9: memref<32x1024xf32, #tpu.memory_space<vmem>>, %arg10: memref<1024x32xf32, #tpu.memory_space<vmem>>, %arg11: memref<32x1xf32, #tpu.memory_space<vmem>>, %arg12: memref<32x128xf32, #tpu.memory_space<vmem>>) attributes {dimension_semantics = [#tpu.dimension_semantics<arbitrary>], iteration_bounds = array<i64: 2>, scalar_prefetch = 0 : i64, scratch_operands = 0 : i64, tpu.core_type = #tpu.core_type<tc>, window_params = [{transform_indices = @transform_0, window_bounds = array<i64: 32, 8>}, {transform_indices = @transform_1, window_bounds = array<i64: 32, 32>}, {transform_indices = @transform_2, window_bounds = array<i64: 32, 1>}, {pipeline_mode = #tpu.pipeline_mode<synchronous>, transform_indices = @transform_3, window_bounds = array<i64: 32, 128>}, {pipeline_mode = #tpu.pipeline_mode<synchronous>, transform_indices = @transform_4, window_bounds = array<i64: 8, 64>}, {pipeline_mode = #tpu.pipeline_mode<synchronous>, transform_indices = @transform_5, window_bounds = array<i64: 1, 64>}, {pipeline_mode = #tpu.pipeline_mode<synchronous>, transform_indices = @transform_6, window_bounds = array<i64: 64, 1024>}, {pipeline_mode = #tpu.pipeline_mode<synchronous>, transform_indices = @transform_7, window_bounds = array<i64: 1, 1024>}, {pipeline_mode = #tpu.pipeline_mode<synchronous>, transform_indices = @transform_8, window_bounds = array<i64: 32, 1024>}, {pipeline_mode = #tpu.pipeline_mode<synchronous>, transform_indices = @transform_9, window_bounds = array<i64: 1024, 32>}, {pipeline_mode = #tpu.pipeline_mode<synchronous>, transform_indices = @transform_10, window_bounds = array<i64: 32, 1>}, {pipeline_mode = #tpu.pipeline_mode<synchronous>, transform_indices = @transform_11, window_bounds = array<i64: 32, 128>}]} {
    %c0_i32 = arith.constant 0 : i32
    %0 = arith.cmpi eq, %arg0, %c0_i32 : i32
    %1 = arith.extui %0 : i1 to i32
    %c0_i32_0 = arith.constant 0 : i32
    %2 = arith.cmpi ne, %1, %c0_i32_0 : i32
    scf.if %2 {
      %c0_27 = arith.constant 0 : index
      %c0_28 = arith.constant 0 : index
      %33 = vector.load %arg4[%c0_27, %c0_28] : memref<32x128xf32, #tpu.memory_space<vmem>>, vector<32x128xf32>
      %c0_29 = arith.constant 0 : index
      %c0_30 = arith.constant 0 : index
      %34 = vector.load %arg11[%c0_29, %c0_30] : memref<32x1xf32, #tpu.memory_space<vmem>>, vector<32x1xf32>
      %35 = vector.broadcast %34 : vector<32x1xf32> to vector<32x128xf32>
      %36 = arith.addf %33, %35 : vector<32x128xf32>
      %c0_31 = arith.constant 0 : index
      %c0_32 = arith.constant 0 : index
      %37 = vector.load %arg12[%c0_31, %c0_32] : memref<32x128xf32, #tpu.memory_space<vmem>>, vector<32x128xf32>
      tpu.vector_store %arg12[%c0_31, %c0_32], %36 {strides = array<i32>} : memref<32x128xf32, #tpu.memory_space<vmem>>, vector<32x128xf32>,
    } else {
    }
    %c0 = arith.constant 0 : index
    %c0_1 = arith.constant 0 : index
    %3 = vector.load %arg1[%c0, %c0_1] : memref<32x8xbf16, #tpu.memory_space<vmem>>, vector<32x8xbf16>
    %c0_2 = arith.constant 0 : index
    %c0_3 = arith.constant 0 : index
    %4 = vector.load %arg5[%c0_2, %c0_3] : memref<8x64xbf16, #tpu.memory_space<vmem>>, vector<8x64xbf16>
    %cst = arith.constant dense<0.000000e+00> : vector<32x64xf32>
    %5 = tpu.matmul %3, %4, %cst {dimension_numbers = #tpu.dot_dimension_numbers<[1], [0], [0], [1], [0, 0, 1, 1], [], []>} : vector<32x8xbf16>, vector<8x64xbf16>, vector<32x64xf32> -> vector<32x64xf32>
    %c0_4 = arith.constant 0 : index
    %c0_5 = arith.constant 0 : index
    %6 = vector.load %arg6[%c0_4, %c0_5] : memref<1x64xf32, #tpu.memory_space<vmem>>, vector<1x64xf32>
    %7 = vector.broadcast %6 : vector<1x64xf32> to vector<32x64xf32>
    %8 = arith.addf %5, %7 : vector<32x64xf32>
    %cst_6 = arith.constant 0.000000e+00 : f32
    %9 = vector.broadcast %cst_6 : f32 to vector<32x64xf32>
    %10 = arith.maximumf %8, %9 : vector<32x64xf32>
    %11 = arith.truncf %10 : vector<32x64xf32> to vector<32x64xbf16>
    %c0_7 = arith.constant 0 : index
    %c0_8 = arith.constant 0 : index
    %12 = vector.load %arg7[%c0_7, %c0_8] : memref<64x1024xbf16, #tpu.memory_space<vmem>>, vector<64x1024xbf16>
    %cst_9 = arith.constant dense<0.000000e+00> : vector<32x1024xf32>
    %13 = tpu.matmul %11, %12, %cst_9 {dimension_numbers = #tpu.dot_dimension_numbers<[1], [0], [0], [1], [0, 0, 1, 1], [], []>} : vector<32x64xbf16>, vector<64x1024xbf16>, vector<32x1024xf32> -> vector<32x1024xf32>
    %c0_10 = arith.constant 0 : index
    %c0_11 = arith.constant 0 : index
    %14 = vector.load %arg8[%c0_10, %c0_11] : memref<1x1024xf32, #tpu.memory_space<vmem>>, vector<1x1024xf32>
    %15 = vector.broadcast %14 : vector<1x1024xf32> to vector<32x1024xf32>
    %16 = arith.addf %13, %15 : vector<32x1024xf32>
    %c0_12 = arith.constant 0 : index
    %c0_13 = arith.constant 0 : index
    %17 = vector.load %arg2[%c0_12, %c0_13] : memref<32x32xf32, #tpu.memory_space<vmem>>, vector<32x32xf32>
    %c0_14 = arith.constant 0 : index
    %c0_15 = arith.constant 0 : index
    %18 = vector.load %arg9[%c0_14, %c0_15] : memref<32x1024xf32, #tpu.memory_space<vmem>>, vector<32x1024xf32>
    %cst_16 = arith.constant dense<0.000000e+00> : vector<32x1024xf32>
    %19 = tpu.matmul %17, %18, %cst_16 {dimension_numbers = #tpu.dot_dimension_numbers<[1], [0], [0], [1], [0, 0, 1, 1], [], []>} : vector<32x32xf32>, vector<32x1024xf32>, vector<32x1024xf32> -> vector<32x1024xf32>
    %20 = arith.mulf %19, %16 : vector<32x1024xf32>
    %c0_17 = arith.constant 0 : index
    %c0_18 = arith.constant 0 : index
    %21 = vector.load %arg10[%c0_17, %c0_18] : memref<1024x32xf32, #tpu.memory_space<vmem>>, vector<1024x32xf32>
    %cst_19 = arith.constant dense<0.000000e+00> : vector<32x32xf32>
    %22 = tpu.matmul %20, %21, %cst_19 {dimension_numbers = #tpu.dot_dimension_numbers<[1], [0], [0], [1], [0, 0, 1, 1], [], []>} : vector<32x1024xf32>, vector<1024x32xf32>, vector<32x32xf32> -> vector<32x32xf32>
    %23 = tpu.iota {dimensions = array<i32: 1>} : vector<32x128xi32>
    %c0_20 = arith.constant 0 : index
    %c0_21 = arith.constant 0 : index
    %24 = vector.load %arg3[%c0_20, %c0_21] : memref<32x1xi32, #tpu.memory_space<vmem>>, vector<32x1xi32>
    %25 = vector.broadcast %24 : vector<32x1xi32> to vector<32x128xi32>
    %26 = arith.cmpi eq, %25, %23 : vector<32x128xi32>
    %27 = arith.extui %26 : vector<32x128xi1> to vector<32x128xi32>
    %28 = arith.sitofp %27 : vector<32x128xi32> to vector<32x128xf32>
    %c0_22 = arith.constant 0 : index
    %c0_23 = arith.constant 0 : index
    %29 = vector.load %arg12[%c0_22, %c0_23] : memref<32x128xf32, #tpu.memory_space<vmem>>, vector<32x128xf32>
    %cst_24 = arith.constant dense<0.000000e+00> : vector<32x128xf32>
    %30 = tpu.matmul %22, %28, %cst_24 {dimension_numbers = #tpu.dot_dimension_numbers<[0], [0], [1], [1], [0, 1, 1, 1], [], []>} : vector<32x32xf32>, vector<32x128xf32>, vector<32x128xf32> -> vector<32x128xf32>
    %31 = arith.addf %29, %30 : vector<32x128xf32>
    %c0_25 = arith.constant 0 : index
    %c0_26 = arith.constant 0 : index
    %32 = vector.load %arg12[%c0_25, %c0_26] : memref<32x128xf32, #tpu.memory_space<vmem>>, vector<32x128xf32>
    tpu.vector_store %arg12[%c0_25, %c0_26], %31 {strides = array<i32>} : memref<32x128xf32, #tpu.memory_space<vmem>>, vector<32x128xf32>,
    return
  }
  func.func @transform_0(%arg0: i32) -> (i32, i32) {
    %c0_i32 = arith.constant 0 : i32
    %c0_i32_0 = arith.constant 0 : i32
    return %arg0, %c0_i32 : i32, i32
  }
  func.func @transform_1(%arg0: i32) -> (i32, i32) {
    %c0_i32 = arith.constant 0 : i32
    %c0_i32_0 = arith.constant 0 : i32
    return %arg0, %c0_i32 : i32, i32
  }
  func.func @transform_2(%arg0: i32) -> (i32, i32) {
    %c0_i32 = arith.constant 0 : i32
    %c0_i32_0 = arith.constant 0 : i32
    return %arg0, %c0_i32 : i32, i32
  }
  func.func @transform_3(%arg0: i32) -> (i32, i32) {
    %c0_i32 = arith.constant 0 : i32
    %c0_i32_0 = arith.constant 0 : i32
    %c0_i32_1 = arith.constant 0 : i32
    return %c0_i32, %c0_i32_0 : i32, i32
  }
  func.func @transform_4(%arg0: i32) -> (i32, i32) {
    %c0_i32 = arith.constant 0 : i32
    %c0_i32_0 = arith.constant 0 : i32
    %c0_i32_1 = arith.constant 0 : i32
    return %c0_i32, %c0_i32_0 : i32, i32
  }
  func.func @transform_5(%arg0: i32) -> (i32, i32) {
    %c0_i32 = arith.constant 0 : i32
    %c0_i32_0 = arith.constant 0 : i32
    %c0_i32_1 = arith.constant 0 : i32
    return %c0_i32, %c0_i32_0 : i32, i32
  }
  func.func @transform_6(%arg0: i32) -> (i32, i32) {
    %c0_i32 = arith.constant 0 : i32
    %c0_i32_0 = arith.constant 0 : i32
    %c0_i32_1 = arith.constant 0 : i32
    return %c0_i32, %c0_i32_0 : i32, i32
  }
  func.func @transform_7(%arg0: i32) -> (i32, i32) {
    %c0_i32 = arith.constant 0 : i32
    %c0_i32_0 = arith.constant 0 : i32
    %c0_i32_1 = arith.constant 0 : i32
    return %c0_i32, %c0_i32_0 : i32, i32
  }
  func.func @transform_8(%arg0: i32) -> (i32, i32) {
    %c0_i32 = arith.constant 0 : i32
    %c0_i32_0 = arith.constant 0 : i32
    %c0_i32_1 = arith.constant 0 : i32
    return %c0_i32, %c0_i32_0 : i32, i32
  }
  func.func @transform_9(%arg0: i32) -> (i32, i32) {
    %c0_i32 = arith.constant 0 : i32
    %c0_i32_0 = arith.constant 0 : i32
    %c0_i32_1 = arith.constant 0 : i32
    return %c0_i32, %c0_i32_0 : i32, i32
  }
  func.func @transform_10(%arg0: i32) -> (i32, i32) {
    %c0_i32 = arith.constant 0 : i32
    %c0_i32_0 = arith.constant 0 : i32
    %c0_i32_1 = arith.constant 0 : i32
    return %c0_i32, %c0_i32_0 : i32, i32
  }
  func.func @transform_11(%arg0: i32) -> (i32, i32) {
    %c0_i32 = arith.constant 0 : i32
    %c0_i32_0 = arith.constant 0 : i32
    %c0_i32_1 = arith.constant 0 : i32
    return %c0_i32, %c0_i32_0 : i32, i32
  }
}

</mosaic_0001>

<llo_original>
// kernel: tpu_custom_call.1
$region0: #{tpu_custom_call.1}
  #allocation0 [shape = 'u32[]', space=smem, size = 0x4, offset = 0x4, fixed_abs, tag = 'smem constant byte address 0x4 - core index']
  #allocation1 [shape = 'u32[72,128]{1,0:T(1,128)}', space=vmem, size = 0x9000, scoped, tag = 'internal scratch']
  %s0 = inlined_call_operand.vmem [shape: bf16[64,8], index: 0, kind: input, shape index: {}]
  %s1 = inlined_call_operand.vmem [shape: f32[64,32], index: 1, kind: input, shape index: {}]
  %s2 = inlined_call_operand.vmem [shape: s32[64,1], index: 2, kind: input, shape index: {}]
  %s3 = inlined_call_operand.vmem [shape: f32[32,128], index: 3, kind: input, shape index: {}]
  %s4 = inlined_call_operand.vmem [shape: bf16[8,64], index: 4, kind: input, shape index: {}]
  %s5 = inlined_call_operand.vmem [shape: f32[1,64], index: 5, kind: input, shape index: {}]
  %s6 = inlined_call_operand.vmem [shape: bf16[64,1024], index: 6, kind: input, shape index: {}]
  %s7 = inlined_call_operand.vmem [shape: f32[1,1024], index: 7, kind: input, shape index: {}]
  %s8 = inlined_call_operand.vmem [shape: f32[32,1024], index: 8, kind: input, shape index: {}]
  %s9 = inlined_call_operand.vmem [shape: f32[1024,32], index: 9, kind: input, shape index: {}]
  %s10 = inlined_call_operand.vmem [shape: f32[32,1], index: 10, kind: input, shape index: {}]
  %s11 = inlined_call_operand.hbm [shape: f32[32,128], index: 11, kind: output, shape index: {}]
  %s12 = sld [smem:[#allocation0]]
  $region81: #{tpu_custom_call.1} parent=0
    _
  %s14 = ssub.s32 1, %s12
  %s15 = scalar_select 0, %s14, %s12
  $region1: #{tpu_custom_call.1} parent=0
    #allocation2 [shape = 'u8[16384]{0}', space=vmem, size = 0x4000, scoped, tag = 'output window, operand 0, single buffered']
    #allocation3 [shape = 's32[2]{0}', space=sflag, size = 0x8, scoped, tag = 'scoped memory for tpu_custom_call.1']
    %16 = vsyncpa [#allocation3], 0
    loop: start=0, step=1, limit=4
    $region2: #{tpu_custom_call.1} parent=1 // loop_pre_header
      _
    $region3: #{tpu_custom_call.1} parent=1 // loop_header
      %s18 = sphi 0, %s22
      %p19 = scmp.ge.s32.totalorder %s18, 4
      %s28 = sphi 0, %s30
      %s31 = sphi 0, %s28
      %s32 = sphi 0, %s31
      %s48 = sphi 0, %s32
      %s54 = sphi 0, %s56
      %s57 = sphi 0, %s54
      %s58 = sphi 0, %s57
      %s74 = sphi 0, %s58
      %s80 = sphi 0, %s82
      %s83 = sphi 0, %s80
      %s84 = sphi 0, %s83
      %s100 = sphi 0, %s84
      %s104 = sphi 0, %s104
      %s106 = sphi 0, %s104
      %s107 = sphi 0, %s106
      %s121 = sphi 0, %s107
      %s125 = sphi 0, %s125
      %s127 = sphi 0, %s125
      %s128 = sphi 0, %s127
      %s142 = sphi 0, %s128
      %s146 = sphi 0, %s146
      %s148 = sphi 0, %s146
      %s149 = sphi 0, %s148
      %s163 = sphi 0, %s149
      %s167 = sphi 0, %s167
      %s169 = sphi 0, %s167
      %s170 = sphi 0, %s169
      %s184 = sphi 0, %s170
      %s188 = sphi 0, %s188
      %s190 = sphi 0, %s188
      %s191 = sphi 0, %s190
      %s205 = sphi 0, %s191
      %s209 = sphi 0, %s209
      %s211 = sphi 0, %s209
      %s212 = sphi 0, %s211
      %s226 = sphi 0, %s212
      %s230 = sphi 0, %s230
      %s232 = sphi 0, %s230
      %s233 = sphi 0, %s232
      %s247 = sphi 0, %s233
      %s251 = sphi 0, %s251
      %s253 = sphi 0, %s251
      %s254 = sphi 0, %s253
      %s268 = sphi 0, %s254
      %s272 = sphi 0, %s272
      %s274 = sphi 0, %s272
      %s275 = sphi 0, %s274
      %s289 = sphi 0, %s275
    $region4: #{tpu_custom_call.1} parent=1 // loop_header_branch
      %21 = sbr.rel (%p19) target = $region8
    $region5: #{tpu_custom_call.1} parent=1 // loop_body
      %s23 = ssub.s32 %s18, 1
      %s24 = ssub.s32 %s18, 2
      %s25 = sadd.s32 %s18, 1
      %s26 = ssub.s32 %s18, %s25
      %p27 = scmp.eq.s32.totalorder %s26, 0
      %s29 = sadd.s32 %s28, 1
      %s30 = scalar_select %p27, %s28, %s29
      %p33 = pneg %p27
      %p34 = scmp.eq.s32.totalorder %s18, 1
      %p35 = por %p33, %p34
      %p36 = scmp.ne.s32.totalorder %s28, %s31
      %p37 = scmp.eq.s32.totalorder %s18, 0
      %p38 = por %p36, %p37
      %p39 = scmp.ne.s32.totalorder %s28, %s31
      %p40 = scmp.eq.s32.totalorder %s23, 1
      %p41 = por %p39, %p40
      %p42 = scmp.ne.s32.totalorder %s31, %s32
      %p43 = scmp.eq.s32.totalorder %s23, 0
      %p44 = por %p42, %p43
      %p45 = scmp.ne.s32.totalorder %s31, %s32
      %p46 = scmp.eq.s32.totalorder %s24, 1
      %p47 = por %p45, %p46
      %p49 = scmp.ne.s32.totalorder %s32, %s48
      %p50 = scmp.eq.s32.totalorder %s24, 0
      %p51 = por %p49, %p50
      %s52 = ssub.s32 %s18, %s25
      %p53 = scmp.eq.s32.totalorder %s52, 0
      %s55 = sadd.s32 %s54, 1
      %s56 = scalar_select %p53, %s54, %s55
      %p59 = pneg %p53
      %p60 = scmp.eq.s32.totalorder %s18, 1
      %p61 = por %p59, %p60
      %p62 = scmp.ne.s32.totalorder %s54, %s57
      %p63 = scmp.eq.s32.totalorder %s18, 0
      %p64 = por %p62, %p63
      %p65 = scmp.ne.s32.totalorder %s54, %s57
      %p66 = scmp.eq.s32.totalorder %s23, 1
      %p67 = por %p65, %p66
      %p68 = scmp.ne.s32.totalorder %s57, %s58
      %p69 = scmp.eq.s32.totalorder %s23, 0
      %p70 = por %p68, %p69
      %p71 = scmp.ne.s32.totalorder %s57, %s58
      %p72 = scmp.eq.s32.totalorder %s24, 1
      %p73 = por %p71, %p72
      %p75 = scmp.ne.s32.totalorder %s58, %s74
      %p76 = scmp.eq.s32.totalorder %s24, 0
      %p77 = por %p75, %p76
      %s78 = ssub.s32 %s18, %s25
      %p79 = scmp.eq.s32.totalorder %s78, 0
      %s81 = sadd.s32 %s80, 1
      %s82 = scalar_select %p79, %s80, %s81
      %p85 = pneg %p79
      %p86 = scmp.eq.s32.totalorder %s18, 1
      %p87 = por %p85, %p86
      %p88 = scmp.ne.s32.totalorder %s80, %s83
      %p89 = scmp.eq.s32.totalorder %s18, 0
      %p90 = por %p88, %p89
      %p91 = scmp.ne.s32.totalorder %s80, %s83
      %p92 = scmp.eq.s32.totalorder %s23, 1
      %p93 = por %p91, %p92
      %p94 = scmp.ne.s32.totalorder %s83, %s84
      %p95 = scmp.eq.s32.totalorder %s23, 0
      %p96 = por %p94, %p95
      %p97 = scmp.ne.s32.totalorder %s83, %s84
      %p98 = scmp.eq.s32.totalorder %s24, 1
      %p99 = por %p97, %p98
      %p101 = scmp.ne.s32.totalorder %s84, %s100
      %p102 = scmp.eq.s32.totalorder %s24, 0
      %p103 = por %p101, %p102
      %s105 = sadd.s32 %s104, 1
      %p108 = scmp.eq.s32.totalorder %s18, 1
      %p109 = scmp.ne.s32.totalorder %s104, %s106
      %p110 = scmp.eq.s32.totalorder %s18, 0
      %p111 = por %p109, %p110
      %p112 = scmp.ne.s32.totalorder %s104, %s106
      %p113 = scmp.eq.s32.totalorder %s23, 1
      %p114 = por %p112, %p113
      %p115 = scmp.ne.s32.totalorder %s106, %s107
      %p116 = scmp.eq.s32.totalorder %s23, 0
      %p117 = por %p115, %p116
      %p118 = scmp.ne.s32.totalorder %s106, %s107
      %p119 = scmp.eq.s32.totalorder %s24, 1
      %p120 = por %p118, %p119
      %p122 = scmp.ne.s32.totalorder %s107, %s121
      %p123 = scmp.eq.s32.totalorder %s24, 0
      %p124 = por %p122, %p123
      %s126 = sadd.s32 %s125, 1
      %p129 = scmp.eq.s32.totalorder %s18, 1
      %p130 = scmp.ne.s32.totalorder %s125, %s127
      %p131 = scmp.eq.s32.totalorder %s18, 0
      %p132 = por %p130, %p131
      %p133 = scmp.ne.s32.totalorder %s125, %s127
      %p134 = scmp.eq.s32.totalorder %s23, 1
      %p135 = por %p133, %p134
      %p136 = scmp.ne.s32.totalorder %s127, %s128
      %p137 = scmp.eq.s32.totalorder %s23, 0
      %p138 = por %p136, %p137
      %p139 = scmp.ne.s32.totalorder %s127, %s128
      %p140 = scmp.eq.s32.totalorder %s24, 1
      %p141 = por %p139, %p140
      %p143 = scmp.ne.s32.totalorder %s128, %s142
      %p144 = scmp.eq.s32.totalorder %s24, 0
      %p145 = por %p143, %p144
      %s147 = sadd.s32 %s146, 1
      %p150 = scmp.eq.s32.totalorder %s18, 1
      %p151 = scmp.ne.s32.totalorder %s146, %s148
      %p152 = scmp.eq.s32.totalorder %s18, 0
      %p153 = por %p151, %p152
      %p154 = scmp.ne.s32.totalorder %s146, %s148
      %p155 = scmp.eq.s32.totalorder %s23, 1
      %p156 = por %p154, %p155
      %p157 = scmp.ne.s32.totalorder %s148, %s149
      %p158 = scmp.eq.s32.totalorder %s23, 0
      %p159 = por %p157, %p158
      %p160 = scmp.ne.s32.totalorder %s148, %s149
      %p161 = scmp.eq.s32.totalorder %s24, 1
      %p162 = por %p160, %p161
      %p164 = scmp.ne.s32.totalorder %s149, %s163
      %p165 = scmp.eq.s32.totalorder %s24, 0
      %p166 = por %p164, %p165
      %s168 = sadd.s32 %s167, 1
      %p171 = scmp.eq.s32.totalorder %s18, 1
      %p172 = scmp.ne.s32.totalorder %s167, %s169
      %p173 = scmp.eq.s32.totalorder %s18, 0
      %p174 = por %p172, %p173
      %p175 = scmp.ne.s32.totalorder %s167, %s169
      %p176 = scmp.eq.s32.totalorder %s23, 1
      %p177 = por %p175, %p176
      %p178 = scmp.ne.s32.totalorder %s169, %s170
      %p179 = scmp.eq.s32.totalorder %s23, 0
      %p180 = por %p178, %p179
      %p181 = scmp.ne.s32.totalorder %s169, %s170
      %p182 = scmp.eq.s32.totalorder %s24, 1
      %p183 = por %p181, %p182
      %p185 = scmp.ne.s32.totalorder %s170, %s184
      %p186 = scmp.eq.s32.totalorder %s24, 0
      %p187 = por %p185, %p186
      %s189 = sadd.s32 %s188, 1
      %p192 = scmp.eq.s32.totalorder %s18, 1
      %p193 = scmp.ne.s32.totalorder %s188, %s190
      %p194 = scmp.eq.s32.totalorder %s18, 0
      %p195 = por %p193, %p194
      %p196 = scmp.ne.s32.totalorder %s188, %s190
      %p197 = scmp.eq.s32.totalorder %s23, 1
      %p198 = por %p196, %p197
      %p199 = scmp.ne.s32.totalorder %s190, %s191
      %p200 = scmp.eq.s32.totalorder %s23, 0
      %p201 = por %p199, %p200
      %p202 = scmp.ne.s32.totalorder %s190, %s191
      %p203 = scmp.eq.s32.totalorder %s24, 1
      %p204 = por %p202, %p203
      %p206 = scmp.ne.s32.totalorder %s191, %s205
      %p207 = scmp.eq.s32.totalorder %s24, 0
      %p208 = por %p206, %p207
      %s210 = sadd.s32 %s209, 1
      %p213 = scmp.eq.s32.totalorder %s18, 1
      %p214 = scmp.ne.s32.totalorder %s209, %s211
      %p215 = scmp.eq.s32.totalorder %s18, 0
      %p216 = por %p214, %p215
      %p217 = scmp.ne.s32.totalorder %s209, %s211
      %p218 = scmp.eq.s32.totalorder %s23, 1
      %p219 = por %p217, %p218
      %p220 = scmp.ne.s32.totalorder %s211, %s212
      %p221 = scmp.eq.s32.totalorder %s23, 0
      %p222 = por %p220, %p221
      %p223 = scmp.ne.s32.totalorder %s211, %s212
      %p224 = scmp.eq.s32.totalorder %s24, 1
      %p225 = por %p223, %p224
      %p227 = scmp.ne.s32.totalorder %s212, %s226
      %p228 = scmp.eq.s32.totalorder %s24, 0
      %p229 = por %p227, %p228
      %s231 = sadd.s32 %s230, 1
      %p234 = scmp.eq.s32.totalorder %s18, 1
      %p235 = scmp.ne.s32.totalorder %s230, %s232
      %p236 = scmp.eq.s32.totalorder %s18, 0
      %p237 = por %p235, %p236
      %p238 = scmp.ne.s32.totalorder %s230, %s232
      %p239 = scmp.eq.s32.totalorder %s23, 1
      %p240 = por %p238, %p239
      %p241 = scmp.ne.s32.totalorder %s232, %s233
      %p242 = scmp.eq.s32.totalorder %s23, 0
      %p243 = por %p241, %p242
      %p244 = scmp.ne.s32.totalorder %s232, %s233
      %p245 = scmp.eq.s32.totalorder %s24, 1
      %p246 = por %p244, %p245
      %p248 = scmp.ne.s32.totalorder %s233, %s247
      %p249 = scmp.eq.s32.totalorder %s24, 0
      %p250 = por %p248, %p249
      %s252 = sadd.s32 %s251, 1
      %p255 = scmp.eq.s32.totalorder %s18, 1
      %p256 = scmp.ne.s32.totalorder %s251, %s253
      %p257 = scmp.eq.s32.totalorder %s18, 0
      %p258 = por %p256, %p257
      %p259 = scmp.ne.s32.totalorder %s251, %s253
      %p260 = scmp.eq.s32.totalorder %s23, 1
      %p261 = por %p259, %p260
      %p262 = scmp.ne.s32.totalorder %s253, %s254
      %p263 = scmp.eq.s32.totalorder %s23, 0
      %p264 = por %p262, %p263
      %p265 = scmp.ne.s32.totalorder %s253, %s254
      %p266 = scmp.eq.s32.totalorder %s24, 1
      %p267 = por %p265, %p266
      %p269 = scmp.ne.s32.totalorder %s254, %s268
      %p270 = scmp.eq.s32.totalorder %s24, 0
      %p271 = por %p269, %p270
      %s273 = sadd.s32 %s272, 1
      %p276 = scmp.eq.s32.totalorder %s18, 1
      %p277 = scmp.ne.s32.totalorder %s272, %s274
      %p278 = scmp.eq.s32.totalorder %s18, 0
      %p279 = por %p277, %p278
      %p280 = scmp.ne.s32.totalorder %s272, %s274
      %p281 = scmp.eq.s32.totalorder %s23, 1
      %p282 = por %p280, %p281
      %p283 = scmp.ne.s32.totalorder %s274, %s275
      %p284 = scmp.eq.s32.totalorder %s23, 0
      %p285 = por %p283, %p284
      %p286 = scmp.ne.s32.totalorder %s274, %s275
      %p287 = scmp.eq.s32.totalorder %s24, 1
      %p288 = por %p286, %p287
      %p290 = scmp.ne.s32.totalorder %s275, %s289
      %p291 = scmp.eq.s32.totalorder %s24, 0
      %p292 = por %p290, %p291
      %p293 = scmp.le.s32.totalorder 1, %s18
      %p294 = scmp.lt.s32.totalorder %s18, 3
      %p295 = pnand %p293, %p294
      %p296 = pneg %p295
      // Predicated region
      $region9: #{tpu_custom_call.1} parent=5 // pred_check
        _
      $region10: #{tpu_custom_call.1} parent=5 // pred_check_branch
        %298 = sbr.rel (%p295) target = $region12
      $region11: #{tpu_custom_call.1} parent=5 // pred_region
        %s299 = ssub.s32 %s18, 1
        // Predicated region
        $region13: #{tpu_custom_call.1} parent=11 // pred_check
          %p300 = pneg %p117
        $region14: #{tpu_custom_call.1} parent=11 // pred_check_branch
          %302 = sbr.rel (%p300) target = $region16
        $region15: #{tpu_custom_call.1} parent=11 // pred_region
          _
        $region16: #{tpu_custom_call.1} parent=11 // pred_fallthru
          _
        // Predicated region
        $region17: #{tpu_custom_call.1} parent=11 // pred_check
          %p303 = pneg %p138
        $region18: #{tpu_custom_call.1} parent=11 // pred_check_branch
          %305 = sbr.rel (%p303) target = $region20
        $region19: #{tpu_custom_call.1} parent=11 // pred_region
          _
        $region20: #{tpu_custom_call.1} parent=11 // pred_fallthru
          _
        // Predicated region
        $region21: #{tpu_custom_call.1} parent=11 // pred_check
          %p306 = pneg %p159
        $region22: #{tpu_custom_call.1} parent=11 // pred_check_branch
          %308 = sbr.rel (%p306) target = $region24
        $region23: #{tpu_custom_call.1} parent=11 // pred_region
          _
        $region24: #{tpu_custom_call.1} parent=11 // pred_fallthru
          _
        // Predicated region
        $region25: #{tpu_custom_call.1} parent=11 // pred_check
          %p309 = pneg %p180
        $region26: #{tpu_custom_call.1} parent=11 // pred_check_branch
          %311 = sbr.rel (%p309) target = $region28
        $region27: #{tpu_custom_call.1} parent=11 // pred_region
          _
        $region28: #{tpu_custom_call.1} parent=11 // pred_fallthru
          _
        // Predicated region
        $region29: #{tpu_custom_call.1} parent=11 // pred_check
          %p312 = pneg %p201
        $region30: #{tpu_custom_call.1} parent=11 // pred_check_branch
          %314 = sbr.rel (%p312) target = $region32
        $region31: #{tpu_custom_call.1} parent=11 // pred_region
          _
        $region32: #{tpu_custom_call.1} parent=11 // pred_fallthru
          _
        // Predicated region
        $region33: #{tpu_custom_call.1} parent=11 // pred_check
          %p315 = pneg %p222
        $region34: #{tpu_custom_call.1} parent=11 // pred_check_branch
          %317 = sbr.rel (%p315) target = $region36
        $region35: #{tpu_custom_call.1} parent=11 // pred_region
          _
        $region36: #{tpu_custom_call.1} parent=11 // pred_fallthru
          _
        // Predicated region
        $region37: #{tpu_custom_call.1} parent=11 // pred_check
          %p318 = pneg %p243
        $region38: #{tpu_custom_call.1} parent=11 // pred_check_branch
          %320 = sbr.rel (%p318) target = $region40
        $region39: #{tpu_custom_call.1} parent=11 // pred_region
          _
        $region40: #{tpu_custom_call.1} parent=11 // pred_fallthru
          _
        // Predicated region
        $region41: #{tpu_custom_call.1} parent=11 // pred_check
          %p321 = pneg %p264
        $region42: #{tpu_custom_call.1} parent=11 // pred_check_branch
          %323 = sbr.rel (%p321) target = $region44
        $region43: #{tpu_custom_call.1} parent=11 // pred_region
          _
        $region44: #{tpu_custom_call.1} parent=11 // pred_fallthru
          _
      $region12: #{tpu_custom_call.1} parent=5 // pred_fallthru
        _
      %p324 = scmp.lt.s32.totalorder %s18, 2
      // Predicated region
      $region45: #{tpu_custom_call.1} parent=5 // pred_check
        %p325 = pneg %p324
      $region46: #{tpu_custom_call.1} parent=5 // pred_check_branch
        %327 = sbr.rel (%p325) target = $region48
      $region47: #{tpu_custom_call.1} parent=5 // pred_region
        // Predicated region
        $region49: #{tpu_custom_call.1} parent=47 // pred_check
          %p328 = pneg %p38
        $region50: #{tpu_custom_call.1} parent=47 // pred_check_branch
          %330 = sbr.rel (%p328) target = $region52
        $region51: #{tpu_custom_call.1} parent=47 // pred_region
          %s331 = smul.u32 4, %s18
          %p332 = scmp.lt.s32.totalorder %s331, 7
          %s333 = scalar_select %p332, %s331, 7
          %s334 = smul.addr %s333, 4
          %s335 = scalar_lea.vmem %s0, %s334
          %s336 = smul.u32 4, %s18
        $region52: #{tpu_custom_call.1} parent=47 // pred_fallthru
          _
        // Predicated region
        $region53: #{tpu_custom_call.1} parent=47 // pred_check
          %p337 = pneg %p64
        $region54: #{tpu_custom_call.1} parent=47 // pred_check_branch
          %339 = sbr.rel (%p337) target = $region56
        $region55: #{tpu_custom_call.1} parent=47 // pred_region
          %s340 = smul.u32 4, %s18
          %p341 = scmp.lt.s32.totalorder %s340, 7
          %s342 = scalar_select %p341, %s340, 7
          %s343 = smul.addr %s342, 8
          %s344 = scalar_lea.vmem %s1, %s343
          %s345 = smul.u32 4, %s18
        $region56: #{tpu_custom_call.1} parent=47 // pred_fallthru
          _
        // Predicated region
        $region57: #{tpu_custom_call.1} parent=47 // pred_check
          %p346 = pneg %p90
        $region58: #{tpu_custom_call.1} parent=47 // pred_check_branch
          %348 = sbr.rel (%p346) target = $region60
        $region59: #{tpu_custom_call.1} parent=47 // pred_region
          %s349 = smul.u32 4, %s18
          %p350 = scmp.lt.s32.totalorder %s349, 7
          %s351 = scalar_select %p350, %s349, 7
          %s352 = smul.addr %s351, 8
          %s353 = scalar_lea.vmem %s2, %s352
          %s354 = smul.u32 4, %s18
        $region60: #{tpu_custom_call.1} parent=47 // pred_fallthru
          _
      $region48: #{tpu_custom_call.1} parent=5 // pred_fallthru
        _
      %p355 = scmp.le.s32.totalorder 1, %s18
      %p356 = scmp.lt.s32.totalorder %s18, 3
      %p357 = pnand %p355, %p356
      %p358 = pneg %p357
      // Predicated region
      $region61: #{tpu_custom_call.1} parent=5 // pred_check
        _
      $region62: #{tpu_custom_call.1} parent=5 // pred_check_branch
        %360 = sbr.rel (%p357) target = $region64
      $region63: #{tpu_custom_call.1} parent=5 // pred_region
        %s361 = ssub.s32 %s18, 1
        %s362 = smul.u32 4, %s23
        %p363 = scmp.lt.s32.totalorder %s362, 7
        %s364 = scalar_select %p363, %s362, 7
        %s365 = smul.addr %s364, 4
        %s366 = scalar_lea.vmem %s0, %s365
        %p367 = pneg %p44
        %p368 = pneg %p41
        %s369 = smul.u32 4, %s23
        %p370 = scmp.lt.s32.totalorder %s369, 7
        %s371 = scalar_select %p370, %s369, 7
        %s372 = smul.addr %s371, 8
        %s373 = scalar_lea.vmem %s1, %s372
        %p374 = pneg %p70
        %p375 = pneg %p67
        %s376 = smul.u32 4, %s23
        %p377 = scmp.lt.s32.totalorder %s376, 7
        %s378 = scalar_select %p377, %s376, 7
        %s379 = smul.addr %s378, 8
        %s380 = scalar_lea.vmem %s2, %s379
        %p381 = pneg %p96
        %p382 = pneg %p93
        %p383 = pneg %p117
        %p384 = pneg %p114
        %p385 = pneg %p138
        %p386 = pneg %p135
        %p387 = pneg %p159
        %p388 = pneg %p156
        %p389 = pneg %p180
        %p390 = pneg %p177
        %p391 = pneg %p201
        %p392 = pneg %p198
        %p393 = pneg %p222
        %p394 = pneg %p219
        %p395 = pneg %p243
        %p396 = pneg %p240
        %p397 = pneg %p264
        %p398 = pneg %p261
        %p399 = pneg %p285
        %p400 = pneg %p282
        %s401 = smul.u32 4, %s23
        %p402 = scmp.lt.s32.totalorder %s401, 7
        %s403 = scalar_select %p402, %s401, 7
        %s404 = smul.addr %s403, 4
        %s405 = scalar_lea.vmem %s0, %s404
        %s406 = smul.u32 4, %s23
        %s407 = smul.u32 4, %s23
        %p408 = scmp.lt.s32.totalorder %s407, 7
        %s409 = scalar_select %p408, %s407, 7
        %s410 = smul.addr %s409, 8
        %s411 = scalar_lea.vmem %s1, %s410
        %s412 = smul.u32 4, %s23
        %s413 = smul.u32 4, %s23
        %p414 = scmp.lt.s32.totalorder %s413, 7
        %s415 = scalar_select %p414, %s413, 7
        %s416 = smul.addr %s415, 8
        %s417 = scalar_lea.vmem %s2, %s416
        %s418 = smul.u32 4, %s23
        %p420 = scmp.eq.s32.totalorder %s23, 0
        // Predicated region
        $region65: #{tpu_custom_call.1} parent=63 // pred_check
          %p421 = pneg %p420
        $region66: #{tpu_custom_call.1} parent=63 // pred_check_branch
          %423 = sbr.rel (%p421) target = $region68
        $region67: #{tpu_custom_call.1} parent=63 // pred_region
          %v424 = vld [vmem:[%s3] sm:$0xff]
          %v425 = vld [vmem:[%s3 + $0x8] sm:$0xff]
          %v426 = vld [vmem:[%s3 + $0x10] sm:$0xff]
          %v427 = vld [vmem:[%s3 + $0x18] sm:$0xff]
          %v428 = vld [vmem:[%s10] sm:$0xff]
          %v429 = vld [vmem:[%s10 + $0x8] sm:$0xff]
          %v430 = vld [vmem:[%s10 + $0x10] sm:$0xff]
          %v431 = vld [vmem:[%s10 + $0x18] sm:$0xff]
          %433 = vset.pattern.permute.xlu0 0
          %434 = vperm.xlu0 %433, %v428
          %v435 = vpop.permute.xlu0 %434
          %438 = vset.pattern.permute.xlu0 0
          %439 = vperm.xlu0 %438, %v429
          %v440 = vpop.permute.xlu0 %439
          %443 = vset.pattern.permute.xlu0 0
          %444 = vperm.xlu0 %443, %v430
          %v445 = vpop.permute.xlu0 %444
          %448 = vset.pattern.permute.xlu0 0
          %449 = vperm.xlu0 %448, %v431
          %v450 = vpop.permute.xlu0 %449
          %v452 = vadd.f32 %v424, %v435
          %v453 = vadd.f32 %v425, %v440
          %v454 = vadd.f32 %v426, %v445
          %v455 = vadd.f32 %v427, %v450
          %456 = vst [vmem:[#allocation2] sm:$0xff] %v452
          %457 = vst [vmem:[#allocation2 + $0x8] sm:$0xff] %v453
          %458 = vst [vmem:[#allocation2 + $0x10] sm:$0xff] %v454
          %459 = vst [vmem:[#allocation2 + $0x18] sm:$0xff] %v455
        $region68: #{tpu_custom_call.1} parent=63 // pred_fallthru
          _
        %v460 = vld [vmem:[%s405] sm:$0xf]
        %v461 = vld [vmem:[%s405 + $0x4] sm:$0xf]
        %v462 = vld [vmem:[%s405 + $0x8] sm:$0xf]
        %v463 = vld [vmem:[%s405 + $0xc] sm:$0xf]
        %v464 = vld [vmem:[%s4] sm:$0xf]
        %v465 = vld [vmem:[%s5] sm:$0x1]
        %v467 = vperm.slane %v465, 0
        %v473 = vunpack.c.l.b16 %v460
        %v474 = vunpack.c.l.b16 %v461
        %v475 = vunpack.c.l.b16 %v462
        %v476 = vunpack.c.l.b16 %v463
        %v477 = vpack.c.b16 %v474, %v473
        %v478 = vpack.c.b16 %v476, %v475
        %vm479 = vcmask 64512
        %v481 = vsel %vm479, %v477, 0
        %v484 = vsel %vm479, %v478, 0
        %vm486 = vcmask 1043456
        %v488 = vsel %vm486, %v464, 0
        %490 = vmatpush.bf16.msra.mxu0 0
        %491 = vmatpush.bf16.msra.mxu0 0
        %492 = vmatpush.bf16.msra.mxu0 0
        %493 = vmatpush.bf16.msra.mxu0 0
        %494 = vmatpush.bf16.msra.mxu0 0
        %495 = vmatpush.bf16.msra.mxu0 0
        %496 = vmatpush.bf16.msra.mxu0 0
        %497 = vmatpush.bf16.msra.mxu0 %v488
        %498 = vmatmul.bf16.gmra.mxu0 %v481
        %v499 = vpop.f32.mrf.mxu0
        %v500 = vadd.f32 %v467, %v499
        %v501 = vpop.f32.mrf.mxu0
        %v502 = vadd.f32 %v467, %v501
        %503 = vmatmul.bf16.gmra.mxu0 %v484
        %v504 = vpop.f32.mrf.mxu0
        %v505 = vadd.f32 %v467, %v504
        %v506 = vpop.f32.mrf.mxu0
        %v507 = vadd.f32 %v467, %v506
        %508 = vdwg.mxu0
        %v509 = vmax.f32 %v500, 0.0
        %v510 = vmax.f32 %v502, 0.0
        %v511 = vmax.f32 %v505, 0.0
        %v512 = vmax.f32 %v507, 0.0
        %v513 = vpack.c.bf16 %v510, %v509
        %v514 = vpack.c.bf16 %v512, %v511
        %v515 = vld [vmem:[%s6] sm:$0xff]
        %v516 = vld [vmem:[%s6 + $0x8] sm:$0xff]
        %v517 = vld [vmem:[%s6 + $0x10] sm:$0xff]
        %v518 = vld [vmem:[%s6 + $0x18] sm:$0xff]
        %v519 = vld [vmem:[%s6 + $0x20] sm:$0xff]
        %v520 = vld [vmem:[%s6 + $0x28] sm:$0xff]
        %v521 = vld [vmem:[%s6 + $0x30] sm:$0xff]
        %v522 = vld [vmem:[%s6 + $0x38] sm:$0xff]
        %v523 = vld [vmem:[%s6 + $0x40] sm:$0xff]
        %v524 = vld [vmem:[%s6 + $0x48] sm:$0xff]
        %v525 = vld [vmem:[%s6 + $0x50] sm:$0xff]
        %v526 = vld [vmem:[%s6 + $0x58] sm:$0xff]
        %v527 = vld [vmem:[%s6 + $0x60] sm:$0xff]
        %v528 = vld [vmem:[%s6 + $0x68] sm:$0xff]
        %v529 = vld [vmem:[%s6 + $0x70] sm:$0xff]
        %v530 = vld [vmem:[%s6 + $0x78] sm:$0xff]
        %v531 = vld [vmem:[%s6 + $0x80] sm:$0xff]
        %v532 = vld [vmem:[%s6 + $0x88] sm:$0xff]
        %v533 = vld [vmem:[%s6 + $0x90] sm:$0xff]
        %v534 = vld [vmem:[%s6 + $0x98] sm:$0xff]
        %v535 = vld [vmem:[%s6 + $0xa0] sm:$0xff]
        %v536 = vld [vmem:[%s6 + $0xa8] sm:$0xff]
        %v537 = vld [vmem:[%s6 + $0xb0] sm:$0xff]
        %v538 = vld [vmem:[%s6 + $0xb8] sm:$0xff]
        %v539 = vld [vmem:[%s6 + $0xc0] sm:$0xff]
        %v540 = vld [vmem:[%s6 + $0xc8] sm:$0xff]
        %v541 = vld [vmem:[%s6 + $0xd0] sm:$0xff]
        %v542 = vld [vmem:[%s6 + $0xd8] sm:$0xff]
        %v543 = vld [vmem:[%s6 + $0xe0] sm:$0xff]
        %v544 = vld [vmem:[%s6 + $0xe8] sm:$0xff]
        %v545 = vld [vmem:[%s6 + $0xf0] sm:$0xff]
        %v546 = vld [vmem:[%s6 + $0xf8] sm:$0xff]
        %v547 = vld [vmem:[%s7] sm:$0xff]
        %v549 = vperm.slane %v547, 0
        %v550 = vperm.slane %v547, 1
        %v551 = vperm.slane %v547, 2
        %v552 = vperm.slane %v547, 3
        %v553 = vperm.slane %v547, 4
        %v554 = vperm.slane %v547, 5
        %v555 = vperm.slane %v547, 6
        %v556 = vperm.slane %v547, 7
        %v597 = vunpack.c.l.b16 %v515
        %v598 = vunpack.c.h.b16 %v515
        %v599 = vunpack.c.l.b16 %v516
        %v600 = vunpack.c.h.b16 %v516
        %v601 = vunpack.c.l.b16 %v517
        %v602 = vunpack.c.h.b16 %v517
        %v603 = vunpack.c.l.b16 %v518
        %v604 = vunpack.c.h.b16 %v518
        %v605 = vunpack.c.l.b16 %v519
        %v606 = vunpack.c.h.b16 %v519
        %v607 = vunpack.c.l.b16 %v520
        %v608 = vunpack.c.h.b16 %v520
        %v609 = vunpack.c.l.b16 %v521
        %v610 = vunpack.c.h.b16 %v521
        %v611 = vunpack.c.l.b16 %v522
        %v612 = vunpack.c.h.b16 %v522
        %v613 = vunpack.c.l.b16 %v523
        %v614 = vunpack.c.h.b16 %v523
        %v615 = vunpack.c.l.b16 %v524
        %v616 = vunpack.c.h.b16 %v524
        %v617 = vunpack.c.l.b16 %v525
        %v618 = vunpack.c.h.b16 %v525
        %v619 = vunpack.c.l.b16 %v526
        %v620 = vunpack.c.h.b16 %v526
        %v621 = vunpack.c.l.b16 %v527
        %v622 = vunpack.c.h.b16 %v527
        %v623 = vunpack.c.l.b16 %v528
        %v624 = vunpack.c.h.b16 %v528
        %v625 = vunpack.c.l.b16 %v529
        %v626 = vunpack.c.h.b16 %v529
        %v627 = vunpack.c.l.b16 %v530
        %v628 = vunpack.c.h.b16 %v530
        %v629 = vunpack.c.l.b16 %v531
        %v630 = vunpack.c.h.b16 %v531
        %v631 = vunpack.c.l.b16 %v532
        %v632 = vunpack.c.h.b16 %v532
        %v633 = vunpack.c.l.b16 %v533
        %v634 = vunpack.c.h.b16 %v533
        %v635 = vunpack.c.l.b16 %v534
        %v636 = vunpack.c.h.b16 %v534
        %v637 = vunpack.c.l.b16 %v535
        %v638 = vunpack.c.h.b16 %v535
        %v639 = vunpack.c.l.b16 %v536
        %v640 = vunpack.c.h.b16 %v536
        %v641 = vunpack.c.l.b16 %v537
        %v642 = vunpack.c.h.b16 %v537
        %v643 = vunpack.c.l.b16 %v538
        %v644 = vunpack.c.h.b16 %v538
        %v645 = vunpack.c.l.b16 %v539
        %v646 = vunpack.c.h.b16 %v539
        %v647 = vunpack.c.l.b16 %v540
        %v648 = vunpack.c.h.b16 %v540
        %v649 = vunpack.c.l.b16 %v541
        %v650 = vunpack.c.h.b16 %v541
        %v651 = vunpack.c.l.b16 %v542
        %v652 = vunpack.c.h.b16 %v542
        %v653 = vunpack.c.l.b16 %v543
        %v654 = vunpack.c.h.b16 %v543
        %v655 = vunpack.c.l.b16 %v544
        %v656 = vunpack.c.h.b16 %v544
        %v657 = vunpack.c.l.b16 %v545
        %v658 = vunpack.c.h.b16 %v545
        %v659 = vunpack.c.l.b16 %v546
        %v660 = vunpack.c.h.b16 %v546
        %v661 = vpack.c.b16 %v605, %v597
        %v662 = vpack.c.b16 %v606, %v598
        %v663 = vpack.c.b16 %v607, %v599
        %v664 = vpack.c.b16 %v608, %v600
        %v665 = vpack.c.b16 %v609, %v601
        %v666 = vpack.c.b16 %v610, %v602
        %v667 = vpack.c.b16 %v611, %v603
        %v668 = vpack.c.b16 %v612, %v604
        %v669 = vpack.c.b16 %v621, %v613
        %v670 = vpack.c.b16 %v622, %v614
        %v671 = vpack.c.b16 %v623, %v615
        %v672 = vpack.c.b16 %v624, %v616
        %v673 = vpack.c.b16 %v625, %v617
        %v674 = vpack.c.b16 %v626, %v618
        %v675 = vpack.c.b16 %v627, %v619
        %v676 = vpack.c.b16 %v628, %v620
        %v677 = vpack.c.b16 %v637, %v629
        %v678 = vpack.c.b16 %v638, %v630
        %v679 = vpack.c.b16 %v639, %v631
        %v680 = vpack.c.b16 %v640, %v632
        %v681 = vpack.c.b16 %v641, %v633
        %v682 = vpack.c.b16 %v642, %v634
        %v683 = vpack.c.b16 %v643, %v635
        %v684 = vpack.c.b16 %v644, %v636
        %v685 = vpack.c.b16 %v653, %v645
        %v686 = vpack.c.b16 %v654, %v646
        %v687 = vpack.c.b16 %v655, %v647
        %v688 = vpack.c.b16 %v656, %v648
        %v689 = vpack.c.b16 %v657, %v649
        %v690 = vpack.c.b16 %v658, %v650
        %v691 = vpack.c.b16 %v659, %v651
        %v692 = vpack.c.b16 %v660, %v652
        %vm725 = vcmask 523264
        %v727 = vsel %vm725, %v513, 0
        %v730 = vsel %vm725, %v514, 0
        %732 = vmatpush.bf16.msra.mxu0 0
        %733 = vmatpush.bf16.msra.mxu0 0
        %734 = vmatpush.bf16.msra.mxu0 0
        %735 = vmatpush.bf16.msra.mxu0 0
        %736 = vmatpush.bf16.msra.mxu0 %v685
        %737 = vmatpush.bf16.msra.mxu0 %v677
        %738 = vmatpush.bf16.msra.mxu0 %v669
        %739 = vmatpush.bf16.msra.mxu0 %v661
        %740 = vmatmul.bf16.gmra.mxu0 %v727
        %v741 = vpop.f32.mrf.mxu0
        %v742 = vadd.f32 %v549, %v741
        %v743 = vpop.f32.mrf.mxu0
        %v744 = vadd.f32 %v549, %v743
        %745 = vmatmul.bf16.gmra.mxu0 %v730
        %v746 = vpop.f32.mrf.mxu0
        %v747 = vadd.f32 %v549, %v746
        %v748 = vpop.f32.mrf.mxu0
        %v749 = vadd.f32 %v549, %v748
        %750 = vdwg.mxu0
        %751 = vmatpush.bf16.msra.mxu0 0
        %752 = vmatpush.bf16.msra.mxu0 0
        %753 = vmatpush.bf16.msra.mxu0 0
        %754 = vmatpush.bf16.msra.mxu0 0
        %755 = vmatpush.bf16.msra.mxu0 %v686
        %756 = vmatpush.bf16.msra.mxu0 %v678
        %757 = vmatpush.bf16.msra.mxu0 %v670
        %758 = vmatpush.bf16.msra.mxu0 %v662
        %759 = vmatmul.bf16.gmra.mxu0 %v727
        %v760 = vpop.f32.mrf.mxu0
        %v761 = vadd.f32 %v550, %v760
        %v762 = vpop.f32.mrf.mxu0
        %v763 = vadd.f32 %v550, %v762
        %764 = vmatmul.bf16.gmra.mxu0 %v730
        %v765 = vpop.f32.mrf.mxu0
        %v766 = vadd.f32 %v550, %v765
        %v767 = vpop.f32.mrf.mxu0
        %v768 = vadd.f32 %v550, %v767
        %769 = vdwg.mxu0
        %770 = vmatpush.bf16.msra.mxu0 0
        %771 = vmatpush.bf16.msra.mxu0 0
        %772 = vmatpush.bf16.msra.mxu0 0
        %773 = vmatpush.bf16.msra.mxu0 0
        %774 = vmatpush.bf16.msra.mxu0 %v687
        %775 = vmatpush.bf16.msra.mxu0 %v679
        %776 = vmatpush.bf16.msra.mxu0 %v671
        %777 = vmatpush.bf16.msra.mxu0 %v663
        %778 = vmatmul.bf16.gmra.mxu0 %v727
        %v779 = vpop.f32.mrf.mxu0
        %v780 = vadd.f32 %v551, %v779
        %v781 = vpop.f32.mrf.mxu0
        %v782 = vadd.f32 %v551, %v781
        %783 = vmatmul.bf16.gmra.mxu0 %v730
        %v784 = vpop.f32.mrf.mxu0
        %v785 = vadd.f32 %v551, %v784
        %v786 = vpop.f32.mrf.mxu0
        %v787 = vadd.f32 %v551, %v786
        %788 = vdwg.mxu0
        %789 = vmatpush.bf16.msra.mxu0 0
        %790 = vmatpush.bf16.msra.mxu0 0
        %791 = vmatpush.bf16.msra.mxu0 0
        %792 = vmatpush.bf16.msra.mxu0 0
        %793 = vmatpush.bf16.msra.mxu0 %v688
        %794 = vmatpush.bf16.msra.mxu0 %v680
        %795 = vmatpush.bf16.msra.mxu0 %v672
        %796 = vmatpush.bf16.msra.mxu0 %v664
        %797 = vmatmul.bf16.gmra.mxu0 %v727
        %v798 = vpop.f32.mrf.mxu0
        %v799 = vadd.f32 %v552, %v798
        %v800 = vpop.f32.mrf.mxu0
        %v801 = vadd.f32 %v552, %v800
        %802 = vmatmul.bf16.gmra.mxu0 %v730
        %v803 = vpop.f32.mrf.mxu0
        %v804 = vadd.f32 %v552, %v803
        %v805 = vpop.f32.mrf.mxu0
        %v806 = vadd.f32 %v552, %v805
        %807 = vdwg.mxu0
        %808 = vmatpush.bf16.msra.mxu0 0
        %809 = vmatpush.bf16.msra.mxu0 0
        %810 = vmatpush.bf16.msra.mxu0 0
        %811 = vmatpush.bf16.msra.mxu0 0
        %812 = vmatpush.bf16.msra.mxu0 %v689
        %813 = vmatpush.bf16.msra.mxu0 %v681
        %814 = vmatpush.bf16.msra.mxu0 %v673
        %815 = vmatpush.bf16.msra.mxu0 %v665
        %816 = vmatmul.bf16.gmra.mxu0 %v727
        %v817 = vpop.f32.mrf.mxu0
        %v818 = vadd.f32 %v553, %v817
        %v819 = vpop.f32.mrf.mxu0
        %v820 = vadd.f32 %v553, %v819
        %821 = vmatmul.bf16.gmra.mxu0 %v730
        %v822 = vpop.f32.mrf.mxu0
        %v823 = vadd.f32 %v553, %v822
        %v824 = vpop.f32.mrf.mxu0
        %v825 = vadd.f32 %v553, %v824
        %826 = vdwg.mxu0
        %827 = vmatpush.bf16.msra.mxu0 0
        %828 = vmatpush.bf16.msra.mxu0 0
        %829 = vmatpush.bf16.msra.mxu0 0
        %830 = vmatpush.bf16.msra.mxu0 0
        %831 = vmatpush.bf16.msra.mxu0 %v690
        %832 = vmatpush.bf16.msra.mxu0 %v682
        %833 = vmatpush.bf16.msra.mxu0 %v674
        %834 = vmatpush.bf16.msra.mxu0 %v666
        %835 = vmatmul.bf16.gmra.mxu0 %v727
        %v836 = vpop.f32.mrf.mxu0
        %v837 = vadd.f32 %v554, %v836
        %v838 = vpop.f32.mrf.mxu0
        %v839 = vadd.f32 %v554, %v838
        %840 = vmatmul.bf16.gmra.mxu0 %v730
        %v841 = vpop.f32.mrf.mxu0
        %v842 = vadd.f32 %v554, %v841
        %v843 = vpop.f32.mrf.mxu0
        %v844 = vadd.f32 %v554, %v843
        %845 = vdwg.mxu0
        %846 = vmatpush.bf16.msra.mxu0 0
        %847 = vmatpush.bf16.msra.mxu0 0
        %848 = vmatpush.bf16.msra.mxu0 0
        %849 = vmatpush.bf16.msra.mxu0 0
        %850 = vmatpush.bf16.msra.mxu0 %v691
        %851 = vmatpush.bf16.msra.mxu0 %v683
        %852 = vmatpush.bf16.msra.mxu0 %v675
        %853 = vmatpush.bf16.msra.mxu0 %v667
        %854 = vmatmul.bf16.gmra.mxu0 %v727
        %v855 = vpop.f32.mrf.mxu0
        %v856 = vadd.f32 %v555, %v855
        %v857 = vpop.f32.mrf.mxu0
        %v858 = vadd.f32 %v555, %v857
        %859 = vmatmul.bf16.gmra.mxu0 %v730
        %v860 = vpop.f32.mrf.mxu0
        %v861 = vadd.f32 %v555, %v860
        %v862 = vpop.f32.mrf.mxu0
        %v863 = vadd.f32 %v555, %v862
        %864 = vdwg.mxu0
        %865 = vmatpush.bf16.msra.mxu0 0
        %866 = vmatpush.bf16.msra.mxu0 0
        %867 = vmatpush.bf16.msra.mxu0 0
        %868 = vmatpush.bf16.msra.mxu0 0
        %869 = vmatpush.bf16.msra.mxu0 %v692
        %870 = vmatpush.bf16.msra.mxu0 %v684
        %871 = vmatpush.bf16.msra.mxu0 %v676
        %872 = vmatpush.bf16.msra.mxu0 %v668
        %873 = vmatmul.bf16.gmra.mxu0 %v727
        %v874 = vpop.f32.mrf.mxu0
        %v875 = vadd.f32 %v556, %v874
        %v876 = vpop.f32.mrf.mxu0
        %v877 = vadd.f32 %v556, %v876
        %878 = vmatmul.bf16.gmra.mxu0 %v730
        %v879 = vpop.f32.mrf.mxu0
        %v880 = vadd.f32 %v556, %v879
        %v881 = vpop.f32.mrf.mxu0
        %v882 = vadd.f32 %v556, %v881
        %883 = vdwg.mxu0
        %v884 = vld [vmem:[%s411] sm:$0xff]
        %v885 = vld [vmem:[%s411 + $0x8] sm:$0xff]
        %v886 = vld [vmem:[%s411 + $0x10] sm:$0xff]
        %v887 = vld [vmem:[%s411 + $0x18] sm:$0xff]
        %v888 = vld [vmem:[%s8] sm:$0xff]
        %v889 = vld [vmem:[%s8 + $0x8] sm:$0xff]
        %v890 = vld [vmem:[%s8 + $0x10] sm:$0xff]
        %v891 = vld [vmem:[%s8 + $0x18] sm:$0xff]
        %v892 = vld [vmem:[%s8 + $0x20] sm:$0xff]
        %v893 = vld [vmem:[%s8 + $0x28] sm:$0xff]
        %v894 = vld [vmem:[%s8 + $0x30] sm:$0xff]
        %v895 = vld [vmem:[%s8 + $0x38] sm:$0xff]
        %v896 = vld [vmem:[%s8 + $0x40] sm:$0xff]
        %v897 = vld [vmem:[%s8 + $0x48] sm:$0xff]
        %v898 = vld [vmem:[%s8 + $0x50] sm:$0xff]
        %v899 = vld [vmem:[%s8 + $0x58] sm:$0xff]
        %v900 = vld [vmem:[%s8 + $0x60] sm:$0xff]
        %v901 = vld [vmem:[%s8 + $0x68] sm:$0xff]
        %v902 = vld [vmem:[%s8 + $0x70] sm:$0xff]
        %v903 = vld [vmem:[%s8 + $0x78] sm:$0xff]
        %v904 = vld [vmem:[%s8 + $0x80] sm:$0xff]
        %v905 = vld [vmem:[%s8 + $0x88] sm:$0xff]
        %v906 = vld [vmem:[%s8 + $0x90] sm:$0xff]
        %v907 = vld [vmem:[%s8 + $0x98] sm:$0xff]
        %v908 = vld [vmem:[%s8 + $0xa0] sm:$0xff]
        %v909 = vld [vmem:[%s8 + $0xa8] sm:$0xff]
        %v910 = vld [vmem:[%s8 + $0xb0] sm:$0xff]
        %v911 = vld [vmem:[%s8 + $0xb8] sm:$0xff]
        %v912 = vld [vmem:[%s8 + $0xc0] sm:$0xff]
        %v913 = vld [vmem:[%s8 + $0xc8] sm:$0xff]
        %v914 = vld [vmem:[%s8 + $0xd0] sm:$0xff]
        %v915 = vld [vmem:[%s8 + $0xd8] sm:$0xff]
        %v916 = vld [vmem:[%s8 + $0xe0] sm:$0xff]
        %v917 = vld [vmem:[%s8 + $0xe8] sm:$0xff]
        %v918 = vld [vmem:[%s8 + $0xf0] sm:$0xff]
        %v919 = vld [vmem:[%s8 + $0xf8] sm:$0xff]
        %vm920 = vcmask 261120
        %v922 = vsel %vm920, %v884, 0
        %v925 = vsel %vm920, %v885, 0
        %v928 = vsel %vm920, %v886, 0
        %v931 = vsel %vm920, %v887, 0
        %933 = vmatpush.msra.mxu0 0.0
        %934 = vmatpush.msra.mxu0 0.0
        %935 = vmatpush.msra.mxu0 0.0
        %936 = vmatpush.msra.mxu0 0.0
        %937 = vmatpush.msra.mxu0 0.0
        %938 = vmatpush.msra.mxu0 0.0
        %939 = vmatpush.msra.mxu0 0.0
        %940 = vmatpush.msra.mxu0 0.0
        %941 = vmatpush.msra.mxu0 0.0
        %942 = vmatpush.msra.mxu0 0.0
        %943 = vmatpush.msra.mxu0 0.0
        %944 = vmatpush.msra.mxu0 0.0
        %945 = vmatpush.msra.mxu0 %v912
        %946 = vmatpush.msra.mxu0 %v904
        %947 = vmatpush.msra.mxu0 %v896
        %948 = vmatpush.msra.mxu0 %v888
        %949 = vmatmul.f32.gmra.mxu0 %v922
        %v950 = vpop.f32.mrf.mxu0
        %v951 = vadd.f32 0.0, %v950
        %952 = vmatmul.f32.gmra.mxu0 %v925
        %v953 = vpop.f32.mrf.mxu0
        %v954 = vadd.f32 0.0, %v953
        %955 = vmatmul.f32.gmra.mxu0 %v928
        %v956 = vpop.f32.mrf.mxu0
        %v957 = vadd.f32 0.0, %v956
        %958 = vmatmul.f32.gmra.mxu0 %v931
        %v959 = vpop.f32.mrf.mxu0
        %v960 = vadd.f32 0.0, %v959
        %961 = vdwg.mxu0
        %962 = vmatpush.msra.mxu0 0.0
        %963 = vmatpush.msra.mxu0 0.0
        %964 = vmatpush.msra.mxu0 0.0
        %965 = vmatpush.msra.mxu0 0.0
        %966 = vmatpush.msra.mxu0 0.0
        %967 = vmatpush.msra.mxu0 0.0
        %968 = vmatpush.msra.mxu0 0.0
        %969 = vmatpush.msra.mxu0 0.0
        %970 = vmatpush.msra.mxu0 0.0
        %971 = vmatpush.msra.mxu0 0.0
        %972 = vmatpush.msra.mxu0 0.0
        %973 = vmatpush.msra.mxu0 0.0
        %974 = vmatpush.msra.mxu0 %v913
        %975 = vmatpush.msra.mxu0 %v905
        %976 = vmatpush.msra.mxu0 %v897
        %977 = vmatpush.msra.mxu0 %v889
        %978 = vmatmul.f32.gmra.mxu0 %v922
        %v979 = vpop.f32.mrf.mxu0
        %v980 = vadd.f32 0.0, %v979
        %981 = vmatmul.f32.gmra.mxu0 %v925
        %v982 = vpop.f32.mrf.mxu0
        %v983 = vadd.f32 0.0, %v982
        %984 = vmatmul.f32.gmra.mxu0 %v928
        %v985 = vpop.f32.mrf.mxu0
        %v986 = vadd.f32 0.0, %v985
        %987 = vmatmul.f32.gmra.mxu0 %v931
        %v988 = vpop.f32.mrf.mxu0
        %v989 = vadd.f32 0.0, %v988
        %990 = vdwg.mxu0
        %991 = vmatpush.msra.mxu0 0.0
        %992 = vmatpush.msra.mxu0 0.0
        %993 = vmatpush.msra.mxu0 0.0
        %994 = vmatpush.msra.mxu0 0.0
        %995 = vmatpush.msra.mxu0 0.0
        %996 = vmatpush.msra.mxu0 0.0
        %997 = vmatpush.msra.mxu0 0.0
        %998 = vmatpush.msra.mxu0 0.0
        %999 = vmatpush.msra.mxu0 0.0
        %1000 = vmatpush.msra.mxu0 0.0
        %1001 = vmatpush.msra.mxu0 0.0
        %1002 = vmatpush.msra.mxu0 0.0
        %1003 = vmatpush.msra.mxu0 %v914
        %1004 = vmatpush.msra.mxu0 %v906
        %1005 = vmatpush.msra.mxu0 %v898
        %1006 = vmatpush.msra.mxu0 %v890
        %1007 = vmatmul.f32.gmra.mxu0 %v922
        %v1008 = vpop.f32.mrf.mxu0
        %v1009 = vadd.f32 0.0, %v1008
        %1010 = vmatmul.f32.gmra.mxu0 %v925
        %v1011 = vpop.f32.mrf.mxu0
        %v1012 = vadd.f32 0.0, %v1011
        %1013 = vmatmul.f32.gmra.mxu0 %v928
        %v1014 = vpop.f32.mrf.mxu0
        %v1015 = vadd.f32 0.0, %v1014
        %1016 = vmatmul.f32.gmra.mxu0 %v931
        %v1017 = vpop.f32.mrf.mxu0
        %v1018 = vadd.f32 0.0, %v1017
        %1019 = vdwg.mxu0
        %1020 = vmatpush.msra.mxu0 0.0
        %1021 = vmatpush.msra.mxu0 0.0
        %1022 = vmatpush.msra.mxu0 0.0
        %1023 = vmatpush.msra.mxu0 0.0
        %1024 = vmatpush.msra.mxu0 0.0
        %1025 = vmatpush.msra.mxu0 0.0
        %1026 = vmatpush.msra.mxu0 0.0
        %1027 = vmatpush.msra.mxu0 0.0
        %1028 = vmatpush.msra.mxu0 0.0
        %1029 = vmatpush.msra.mxu0 0.0
        %1030 = vmatpush.msra.mxu0 0.0
        %1031 = vmatpush.msra.mxu0 0.0
        %1032 = vmatpush.msra.mxu0 %v915
        %1033 = vmatpush.msra.mxu0 %v907
        %1034 = vmatpush.msra.mxu0 %v899
        %1035 = vmatpush.msra.mxu0 %v891
        %1036 = vmatmul.f32.gmra.mxu0 %v922
        %v1037 = vpop.f32.mrf.mxu0
        %v1038 = vadd.f32 0.0, %v1037
        %1039 = vmatmul.f32.gmra.mxu0 %v925
        %v1040 = vpop.f32.mrf.mxu0
        %v1041 = vadd.f32 0.0, %v1040
        %1042 = vmatmul.f32.gmra.mxu0 %v928
        %v1043 = vpop.f32.mrf.mxu0
        %v1044 = vadd.f32 0.0, %v1043
        %1045 = vmatmul.f32.gmra.mxu0 %v931
        %v1046 = vpop.f32.mrf.mxu0
        %v1047 = vadd.f32 0.0, %v1046
        %1048 = vdwg.mxu0
        %1049 = vmatpush.msra.mxu0 0.0
        %1050 = vmatpush.msra.mxu0 0.0
        %1051 = vmatpush.msra.mxu0 0.0
        %1052 = vmatpush.msra.mxu0 0.0
        %1053 = vmatpush.msra.mxu0 0.0
        %1054 = vmatpush.msra.mxu0 0.0
        %1055 = vmatpush.msra.mxu0 0.0
        %1056 = vmatpush.msra.mxu0 0.0
        %1057 = vmatpush.msra.mxu0 0.0
        %1058 = vmatpush.msra.mxu0 0.0
        %1059 = vmatpush.msra.mxu0 0.0
        %1060 = vmatpush.msra.mxu0 0.0
        %1061 = vmatpush.msra.mxu0 %v916
        %1062 = vmatpush.msra.mxu0 %v908
        %1063 = vmatpush.msra.mxu0 %v900
        %1064 = vmatpush.msra.mxu0 %v892
        %1065 = vmatmul.f32.gmra.mxu0 %v922
        %v1066 = vpop.f32.mrf.mxu0
        %v1067 = vadd.f32 0.0, %v1066
        %1068 = vmatmul.f32.gmra.mxu0 %v925
        %v1069 = vpop.f32.mrf.mxu0
        %v1070 = vadd.f32 0.0, %v1069
        %1071 = vmatmul.f32.gmra.mxu0 %v928
        %v1072 = vpop.f32.mrf.mxu0
        %v1073 = vadd.f32 0.0, %v1072
        %1074 = vmatmul.f32.gmra.mxu0 %v931
        %v1075 = vpop.f32.mrf.mxu0
        %v1076 = vadd.f32 0.0, %v1075
        %1077 = vdwg.mxu0
        %1078 = vmatpush.msra.mxu0 0.0
        %1079 = vmatpush.msra.mxu0 0.0
        %1080 = vmatpush.msra.mxu0 0.0
        %1081 = vmatpush.msra.mxu0 0.0
        %1082 = vmatpush.msra.mxu0 0.0
        %1083 = vmatpush.msra.mxu0 0.0
        %1084 = vmatpush.msra.mxu0 0.0
        %1085 = vmatpush.msra.mxu0 0.0
        %1086 = vmatpush.msra.mxu0 0.0
        %1087 = vmatpush.msra.mxu0 0.0
        %1088 = vmatpush.msra.mxu0 0.0
        %1089 = vmatpush.msra.mxu0 0.0
        %1090 = vmatpush.msra.mxu0 %v917
        %1091 = vmatpush.msra.mxu0 %v909
        %1092 = vmatpush.msra.mxu0 %v901
        %1093 = vmatpush.msra.mxu0 %v893
        %1094 = vmatmul.f32.gmra.mxu0 %v922
        %v1095 = vpop.f32.mrf.mxu0
        %v1096 = vadd.f32 0.0, %v1095
        %1097 = vmatmul.f32.gmra.mxu0 %v925
        %v1098 = vpop.f32.mrf.mxu0
        %v1099 = vadd.f32 0.0, %v1098
        %1100 = vmatmul.f32.gmra.mxu0 %v928
        %v1101 = vpop.f32.mrf.mxu0
        %v1102 = vadd.f32 0.0, %v1101
        %1103 = vmatmul.f32.gmra.mxu0 %v931
        %v1104 = vpop.f32.mrf.mxu0
        %v1105 = vadd.f32 0.0, %v1104
        %1106 = vdwg.mxu0
        %1107 = vmatpush.msra.mxu0 0.0
        %1108 = vmatpush.msra.mxu0 0.0
        %1109 = vmatpush.msra.mxu0 0.0
        %1110 = vmatpush.msra.mxu0 0.0
        %1111 = vmatpush.msra.mxu0 0.0
        %1112 = vmatpush.msra.mxu0 0.0
        %1113 = vmatpush.msra.mxu0 0.0
        %1114 = vmatpush.msra.mxu0 0.0
        %1115 = vmatpush.msra.mxu0 0.0
        %1116 = vmatpush.msra.mxu0 0.0
        %1117 = vmatpush.msra.mxu0 0.0
        %1118 = vmatpush.msra.mxu0 0.0
        %1119 = vmatpush.msra.mxu0 %v918
        %1120 = vmatpush.msra.mxu0 %v910
        %1121 = vmatpush.msra.mxu0 %v902
        %1122 = vmatpush.msra.mxu0 %v894
        %1123 = vmatmul.f32.gmra.mxu0 %v922
        %v1124 = vpop.f32.mrf.mxu0
        %v1125 = vadd.f32 0.0, %v1124
        %1126 = vmatmul.f32.gmra.mxu0 %v925
        %v1127 = vpop.f32.mrf.mxu0
        %v1128 = vadd.f32 0.0, %v1127
        %1129 = vmatmul.f32.gmra.mxu0 %v928
        %v1130 = vpop.f32.mrf.mxu0
        %v1131 = vadd.f32 0.0, %v1130
        %1132 = vmatmul.f32.gmra.mxu0 %v931
        %v1133 = vpop.f32.mrf.mxu0
        %v1134 = vadd.f32 0.0, %v1133
        %1135 = vdwg.mxu0
        %1136 = vmatpush.msra.mxu0 0.0
        %1137 = vmatpush.msra.mxu0 0.0
        %1138 = vmatpush.msra.mxu0 0.0
        %1139 = vmatpush.msra.mxu0 0.0
        %1140 = vmatpush.msra.mxu0 0.0
        %1141 = vmatpush.msra.mxu0 0.0
        %1142 = vmatpush.msra.mxu0 0.0
        %1143 = vmatpush.msra.mxu0 0.0
        %1144 = vmatpush.msra.mxu0 0.0
        %1145 = vmatpush.msra.mxu0 0.0
        %1146 = vmatpush.msra.mxu0 0.0
        %1147 = vmatpush.msra.mxu0 0.0
        %1148 = vmatpush.msra.mxu0 %v919
        %1149 = vmatpush.msra.mxu0 %v911
        %1150 = vmatpush.msra.mxu0 %v903
        %1151 = vmatpush.msra.mxu0 %v895
        %1152 = vmatmul.f32.gmra.mxu0 %v922
        %v1153 = vpop.f32.mrf.mxu0
        %v1154 = vadd.f32 0.0, %v1153
        %1155 = vmatmul.f32.gmra.mxu0 %v925
        %v1156 = vpop.f32.mrf.mxu0
        %v1157 = vadd.f32 0.0, %v1156
        %1158 = vmatmul.f32.gmra.mxu0 %v928
        %v1159 = vpop.f32.mrf.mxu0
        %v1160 = vadd.f32 0.0, %v1159
        %1161 = vmatmul.f32.gmra.mxu0 %v931
        %v1162 = vpop.f32.mrf.mxu0
        %v1163 = vadd.f32 0.0, %v1162
        %1164 = vdwg.mxu0
        %v1165 = vmul.f32 %v951, %v742
        %v1166 = vmul.f32 %v980, %v761
        %v1167 = vmul.f32 %v1009, %v780
        %v1168 = vmul.f32 %v1038, %v799
        %v1169 = vmul.f32 %v1067, %v818
        %v1170 = vmul.f32 %v1096, %v837
        %v1171 = vmul.f32 %v1125, %v856
        %v1172 = vmul.f32 %v1154, %v875
        %v1173 = vmul.f32 %v954, %v744
        %v1174 = vmul.f32 %v983, %v763
        %v1175 = vmul.f32 %v1012, %v782
        %v1176 = vmul.f32 %v1041, %v801
        %v1177 = vmul.f32 %v1070, %v820
        %v1178 = vmul.f32 %v1099, %v839
        %v1179 = vmul.f32 %v1128, %v858
        %v1180 = vmul.f32 %v1157, %v877
        %v1181 = vmul.f32 %v957, %v747
        %v1182 = vmul.f32 %v986, %v766
        %v1183 = vmul.f32 %v1015, %v785
        %v1184 = vmul.f32 %v1044, %v804
        %v1185 = vmul.f32 %v1073, %v823
        %v1186 = vmul.f32 %v1102, %v842
        %v1187 = vmul.f32 %v1131, %v861
        %v1188 = vmul.f32 %v1160, %v880
        %v1189 = vmul.f32 %v960, %v749
        %v1190 = vmul.f32 %v989, %v768
        %v1191 = vmul.f32 %v1018, %v787
        %v1192 = vmul.f32 %v1047, %v806
        %v1193 = vmul.f32 %v1076, %v825
        %v1194 = vmul.f32 %v1105, %v844
        %v1195 = vmul.f32 %v1134, %v863
        %v1196 = vmul.f32 %v1163, %v882
        %v1197 = vld [vmem:[%s9] sm:$0xff]
        %v1198 = vld [vmem:[%s9 + $0x8] sm:$0xff]
        %v1199 = vld [vmem:[%s9 + $0x10] sm:$0xff]
        %v1200 = vld [vmem:[%s9 + $0x18] sm:$0xff]
        %v1201 = vld [vmem:[%s9 + $0x20] sm:$0xff]
        %v1202 = vld [vmem:[%s9 + $0x28] sm:$0xff]
        %v1203 = vld [vmem:[%s9 + $0x30] sm:$0xff]
        %v1204 = vld [vmem:[%s9 + $0x38] sm:$0xff]
        %v1205 = vld [vmem:[%s9 + $0x40] sm:$0xff]
        %v1206 = vld [vmem:[%s9 + $0x48] sm:$0xff]
        %v1207 = vld [vmem:[%s9 + $0x50] sm:$0xff]
        %v1208 = vld [vmem:[%s9 + $0x58] sm:$0xff]
        %v1209 = vld [vmem:[%s9 + $0x60] sm:$0xff]
        %v1210 = vld [vmem:[%s9 + $0x68] sm:$0xff]
        %v1211 = vld [vmem:[%s9 + $0x70] sm:$0xff]
        %v1212 = vld [vmem:[%s9 + $0x78] sm:$0xff]
        %v1213 = vld [vmem:[%s9 + $0x80] sm:$0xff]
        %v1214 = vld [vmem:[%s9 + $0x88] sm:$0xff]
        %v1215 = vld [vmem:[%s9 + $0x90] sm:$0xff]
        %v1216 = vld [vmem:[%s9 + $0x98] sm:$0xff]
        %v1217 = vld [vmem:[%s9 + $0xa0] sm:$0xff]
        %v1218 = vld [vmem:[%s9 + $0xa8] sm:$0xff]
        %v1219 = vld [vmem:[%s9 + $0xb0] sm:$0xff]
        %v1220 = vld [vmem:[%s9 + $0xb8] sm:$0xff]
        %v1221 = vld [vmem:[%s9 + $0xc0] sm:$0xff]
        %v1222 = vld [vmem:[%s9 + $0xc8] sm:$0xff]
        %v1223 = vld [vmem:[%s9 + $0xd0] sm:$0xff]
        %v1224 = vld [vmem:[%s9 + $0xd8] sm:$0xff]
        %v1225 = vld [vmem:[%s9 + $0xe0] sm:$0xff]
        %v1226 = vld [vmem:[%s9 + $0xe8] sm:$0xff]
        %v1227 = vld [vmem:[%s9 + $0xf0] sm:$0xff]
        %v1228 = vld [vmem:[%s9 + $0xf8] sm:$0xff]
        %v1229 = vld [vmem:[%s9 + $0x100] sm:$0xff]
        %v1230 = vld [vmem:[%s9 + $0x108] sm:$0xff]
        %v1231 = vld [vmem:[%s9 + $0x110] sm:$0xff]
        %v1232 = vld [vmem:[%s9 + $0x118] sm:$0xff]
        %v1233 = vld [vmem:[%s9 + $0x120] sm:$0xff]
        %v1234 = vld [vmem:[%s9 + $0x128] sm:$0xff]
        %v1235 = vld [vmem:[%s9 + $0x130] sm:$0xff]
        %v1236 = vld [vmem:[%s9 + $0x138] sm:$0xff]
        %v1237 = vld [vmem:[%s9 + $0x140] sm:$0xff]
        %v1238 = vld [vmem:[%s9 + $0x148] sm:$0xff]
        %v1239 = vld [vmem:[%s9 + $0x150] sm:$0xff]
        %v1240 = vld [vmem:[%s9 + $0x158] sm:$0xff]
        %v1241 = vld [vmem:[%s9 + $0x160] sm:$0xff]
        %v1242 = vld [vmem:[%s9 + $0x168] sm:$0xff]
        %v1243 = vld [vmem:[%s9 + $0x170] sm:$0xff]
        %v1244 = vld [vmem:[%s9 + $0x178] sm:$0xff]
        %v1245 = vld [vmem:[%s9 + $0x180] sm:$0xff]
        %v1246 = vld [vmem:[%s9 + $0x188] sm:$0xff]
        %v1247 = vld [vmem:[%s9 + $0x190] sm:$0xff]
        %v1248 = vld [vmem:[%s9 + $0x198] sm:$0xff]
        %v1249 = vld [vmem:[%s9 + $0x1a0] sm:$0xff]
        %v1250 = vld [vmem:[%s9 + $0x1a8] sm:$0xff]
        %v1251 = vld [vmem:[%s9 + $0x1b0] sm:$0xff]
        %v1252 = vld [vmem:[%s9 + $0x1b8] sm:$0xff]
        %v1253 = vld [vmem:[%s9 + $0x1c0] sm:$0xff]
        %v1254 = vld [vmem:[%s9 + $0x1c8] sm:$0xff]
        %v1255 = vld [vmem:[%s9 + $0x1d0] sm:$0xff]
        %v1256 = vld [vmem:[%s9 + $0x1d8] sm:$0xff]
        %v1257 = vld [vmem:[%s9 + $0x1e0] sm:$0xff]
        %v1258 = vld [vmem:[%s9 + $0x1e8] sm:$0xff]
        %v1259 = vld [vmem:[%s9 + $0x1f0] sm:$0xff]
        %v1260 = vld [vmem:[%s9 + $0x1f8] sm:$0xff]
        %v1261 = vld [vmem:[%s9 + $0x200] sm:$0xff]
        %v1262 = vld [vmem:[%s9 + $0x208] sm:$0xff]
        %v1263 = vld [vmem:[%s9 + $0x210] sm:$0xff]
        %v1264 = vld [vmem:[%s9 + $0x218] sm:$0xff]
        %v1265 = vld [vmem:[%s9 + $0x220] sm:$0xff]
        %v1266 = vld [vmem:[%s9 + $0x228] sm:$0xff]
        %v1267 = vld [vmem:[%s9 + $0x230] sm:$0xff]
        %v1268 = vld [vmem:[%s9 + $0x238] sm:$0xff]
        %v1269 = vld [vmem:[%s9 + $0x240] sm:$0xff]
        %v1270 = vld [vmem:[%s9 + $0x248] sm:$0xff]
        %v1271 = vld [vmem:[%s9 + $0x250] sm:$0xff]
        %v1272 = vld [vmem:[%s9 + $0x258] sm:$0xff]
        %v1273 = vld [vmem:[%s9 + $0x260] sm:$0xff]
        %v1274 = vld [vmem:[%s9 + $0x268] sm:$0xff]
        %v1275 = vld [vmem:[%s9 + $0x270] sm:$0xff]
        %v1276 = vld [vmem:[%s9 + $0x278] sm:$0xff]
        %v1277 = vld [vmem:[%s9 + $0x280] sm:$0xff]
        %v1278 = vld [vmem:[%s9 + $0x288] sm:$0xff]
        %v1279 = vld [vmem:[%s9 + $0x290] sm:$0xff]
        %v1280 = vld [vmem:[%s9 + $0x298] sm:$0xff]
        %v1281 = vld [vmem:[%s9 + $0x2a0] sm:$0xff]
        %v1282 = vld [vmem:[%s9 + $0x2a8] sm:$0xff]
        %v1283 = vld [vmem:[%s9 + $0x2b0] sm:$0xff]
        %v1284 = vld [vmem:[%s9 + $0x2b8] sm:$0xff]
        %v1285 = vld [vmem:[%s9 + $0x2c0] sm:$0xff]
        %v1286 = vld [vmem:[%s9 + $0x2c8] sm:$0xff]
        %v1287 = vld [vmem:[%s9 + $0x2d0] sm:$0xff]
        %v1288 = vld [vmem:[%s9 + $0x2d8] sm:$0xff]
        %v1289 = vld [vmem:[%s9 + $0x2e0] sm:$0xff]
        %v1290 = vld [vmem:[%s9 + $0x2e8] sm:$0xff]
        %v1291 = vld [vmem:[%s9 + $0x2f0] sm:$0xff]
        %v1292 = vld [vmem:[%s9 + $0x2f8] sm:$0xff]
        %v1293 = vld [vmem:[%s9 + $0x300] sm:$0xff]
        %v1294 = vld [vmem:[%s9 + $0x308] sm:$0xff]
        %v1295 = vld [vmem:[%s9 + $0x310] sm:$0xff]
        %v1296 = vld [vmem:[%s9 + $0x318] sm:$0xff]
        %v1297 = vld [vmem:[%s9 + $0x320] sm:$0xff]
        %v1298 = vld [vmem:[%s9 + $0x328] sm:$0xff]
        %v1299 = vld [vmem:[%s9 + $0x330] sm:$0xff]
        %v1300 = vld [vmem:[%s9 + $0x338] sm:$0xff]
        %v1301 = vld [vmem:[%s9 + $0x340] sm:$0xff]
        %v1302 = vld [vmem:[%s9 + $0x348] sm:$0xff]
        %v1303 = vld [vmem:[%s9 + $0x350] sm:$0xff]
        %v1304 = vld [vmem:[%s9 + $0x358] sm:$0xff]
        %v1305 = vld [vmem:[%s9 + $0x360] sm:$0xff]
        %v1306 = vld [vmem:[%s9 + $0x368] sm:$0xff]
        %v1307 = vld [vmem:[%s9 + $0x370] sm:$0xff]
        %v1308 = vld [vmem:[%s9 + $0x378] sm:$0xff]
        %v1309 = vld [vmem:[%s9 + $0x380] sm:$0xff]
        %v1310 = vld [vmem:[%s9 + $0x388] sm:$0xff]
        %v1311 = vld [vmem:[%s9 + $0x390] sm:$0xff]
        %v1312 = vld [vmem:[%s9 + $0x398] sm:$0xff]
        %v1313 = vld [vmem:[%s9 + $0x3a0] sm:$0xff]
        %v1314 = vld [vmem:[%s9 + $0x3a8] sm:$0xff]
        %v1315 = vld [vmem:[%s9 + $0x3b0] sm:$0xff]
        %v1316 = vld [vmem:[%s9 + $0x3b8] sm:$0xff]
        %v1317 = vld [vmem:[%s9 + $0x3c0] sm:$0xff]
        %v1318 = vld [vmem:[%s9 + $0x3c8] sm:$0xff]
        %v1319 = vld [vmem:[%s9 + $0x3d0] sm:$0xff]
        %v1320 = vld [vmem:[%s9 + $0x3d8] sm:$0xff]
        %v1321 = vld [vmem:[%s9 + $0x3e0] sm:$0xff]
        %v1322 = vld [vmem:[%s9 + $0x3e8] sm:$0xff]
        %v1323 = vld [vmem:[%s9 + $0x3f0] sm:$0xff]
        %v1324 = vld [vmem:[%s9 + $0x3f8] sm:$0xff]
        %1325 = vmatpush.msra.mxu0 %v1212
        %1326 = vmatpush.msra.mxu0 %v1211
        %1327 = vmatpush.msra.mxu0 %v1210
        %1328 = vmatpush.msra.mxu0 %v1209
        %1329 = vmatpush.msra.mxu0 %v1208
        %1330 = vmatpush.msra.mxu0 %v1207
        %1331 = vmatpush.msra.mxu0 %v1206
        %1332 = vmatpush.msra.mxu0 %v1205
        %1333 = vmatpush.msra.mxu0 %v1204
        %1334 = vmatpush.msra.mxu0 %v1203
        %1335 = vmatpush.msra.mxu0 %v1202
        %1336 = vmatpush.msra.mxu0 %v1201
        %1337 = vmatpush.msra.mxu0 %v1200
        %1338 = vmatpush.msra.mxu0 %v1199
        %1339 = vmatpush.msra.mxu0 %v1198
        %1340 = vmatpush.msra.mxu0 %v1197
        %1341 = vmatmul.f32.gmra.mxu0 %v1165
        %v1342 = vpop.f32.mrf.mxu0
        %v1343 = vadd.f32 0.0, %v1342
        %1344 = vmatmul.f32.gmra.mxu0 %v1173
        %v1345 = vpop.f32.mrf.mxu0
        %v1346 = vadd.f32 0.0, %v1345
        %1347 = vmatmul.f32.gmra.mxu0 %v1181
        %v1348 = vpop.f32.mrf.mxu0
        %v1349 = vadd.f32 0.0, %v1348
        %1350 = vmatmul.f32.gmra.mxu0 %v1189
        %v1351 = vpop.f32.mrf.mxu0
        %v1352 = vadd.f32 0.0, %v1351
        %1353 = vdwg.mxu0
        %1354 = vmatpush.msra.mxu0 %v1228
        %1355 = vmatpush.msra.mxu0 %v1227
        %1356 = vmatpush.msra.mxu0 %v1226
        %1357 = vmatpush.msra.mxu0 %v1225
        %1358 = vmatpush.msra.mxu0 %v1224
        %1359 = vmatpush.msra.mxu0 %v1223
        %1360 = vmatpush.msra.mxu0 %v1222
        %1361 = vmatpush.msra.mxu0 %v1221
        %1362 = vmatpush.msra.mxu0 %v1220
        %1363 = vmatpush.msra.mxu0 %v1219
        %1364 = vmatpush.msra.mxu0 %v1218
        %1365 = vmatpush.msra.mxu0 %v1217
        %1366 = vmatpush.msra.mxu0 %v1216
        %1367 = vmatpush.msra.mxu0 %v1215
        %1368 = vmatpush.msra.mxu0 %v1214
        %1369 = vmatpush.msra.mxu0 %v1213
        %1370 = vmatmul.f32.gmra.mxu0 %v1166
        %v1371 = vpop.f32.mrf.mxu0
        %v1372 = vadd.f32 %v1343, %v1371
        %1373 = vmatmul.f32.gmra.mxu0 %v1174
        %v1374 = vpop.f32.mrf.mxu0
        %v1375 = vadd.f32 %v1346, %v1374
        %1376 = vmatmul.f32.gmra.mxu0 %v1182
        %v1377 = vpop.f32.mrf.mxu0
        %v1378 = vadd.f32 %v1349, %v1377
        %1379 = vmatmul.f32.gmra.mxu0 %v1190
        %v1380 = vpop.f32.mrf.mxu0
        %v1381 = vadd.f32 %v1352, %v1380
        %1382 = vdwg.mxu0
        %1383 = vmatpush.msra.mxu0 %v1244
        %1384 = vmatpush.msra.mxu0 %v1243
        %1385 = vmatpush.msra.mxu0 %v1242
        %1386 = vmatpush.msra.mxu0 %v1241
        %1387 = vmatpush.msra.mxu0 %v1240
        %1388 = vmatpush.msra.mxu0 %v1239
        %1389 = vmatpush.msra.mxu0 %v1238
        %1390 = vmatpush.msra.mxu0 %v1237
        %1391 = vmatpush.msra.mxu0 %v1236
        %1392 = vmatpush.msra.mxu0 %v1235
        %1393 = vmatpush.msra.mxu0 %v1234
        %1394 = vmatpush.msra.mxu0 %v1233
        %1395 = vmatpush.msra.mxu0 %v1232
        %1396 = vmatpush.msra.mxu0 %v1231
        %1397 = vmatpush.msra.mxu0 %v1230
        %1398 = vmatpush.msra.mxu0 %v1229
        %1399 = vmatmul.f32.gmra.mxu0 %v1167
        %v1400 = vpop.f32.mrf.mxu0
        %v1401 = vadd.f32 %v1372, %v1400
        %1402 = vmatmul.f32.gmra.mxu0 %v1175
        %v1403 = vpop.f32.mrf.mxu0
        %v1404 = vadd.f32 %v1375, %v1403
        %1405 = vmatmul.f32.gmra.mxu0 %v1183
        %v1406 = vpop.f32.mrf.mxu0
        %v1407 = vadd.f32 %v1378, %v1406
        %1408 = vmatmul.f32.gmra.mxu0 %v1191
        %v1409 = vpop.f32.mrf.mxu0
        %v1410 = vadd.f32 %v1381, %v1409
        %1411 = vdwg.mxu0
        %1412 = vmatpush.msra.mxu0 %v1260
        %1413 = vmatpush.msra.mxu0 %v1259
        %1414 = vmatpush.msra.mxu0 %v1258
        %1415 = vmatpush.msra.mxu0 %v1257
        %1416 = vmatpush.msra.mxu0 %v1256
        %1417 = vmatpush.msra.mxu0 %v1255
        %1418 = vmatpush.msra.mxu0 %v1254
        %1419 = vmatpush.msra.mxu0 %v1253
        %1420 = vmatpush.msra.mxu0 %v1252
        %1421 = vmatpush.msra.mxu0 %v1251
        %1422 = vmatpush.msra.mxu0 %v1250
        %1423 = vmatpush.msra.mxu0 %v1249
        %1424 = vmatpush.msra.mxu0 %v1248
        %1425 = vmatpush.msra.mxu0 %v1247
        %1426 = vmatpush.msra.mxu0 %v1246
        %1427 = vmatpush.msra.mxu0 %v1245
        %1428 = vmatmul.f32.gmra.mxu0 %v1168
        %v1429 = vpop.f32.mrf.mxu0
        %v1430 = vadd.f32 %v1401, %v1429
        %1431 = vmatmul.f32.gmra.mxu0 %v1176
        %v1432 = vpop.f32.mrf.mxu0
        %v1433 = vadd.f32 %v1404, %v1432
        %1434 = vmatmul.f32.gmra.mxu0 %v1184
        %v1435 = vpop.f32.mrf.mxu0
        %v1436 = vadd.f32 %v1407, %v1435
        %1437 = vmatmul.f32.gmra.mxu0 %v1192
        %v1438 = vpop.f32.mrf.mxu0
        %v1439 = vadd.f32 %v1410, %v1438
        %1440 = vdwg.mxu0
        %1441 = vmatpush.msra.mxu0 %v1276
        %1442 = vmatpush.msra.mxu0 %v1275
        %1443 = vmatpush.msra.mxu0 %v1274
        %1444 = vmatpush.msra.mxu0 %v1273
        %1445 = vmatpush.msra.mxu0 %v1272
        %1446 = vmatpush.msra.mxu0 %v1271
        %1447 = vmatpush.msra.mxu0 %v1270
        %1448 = vmatpush.msra.mxu0 %v1269
        %1449 = vmatpush.msra.mxu0 %v1268
        %1450 = vmatpush.msra.mxu0 %v1267
        %1451 = vmatpush.msra.mxu0 %v1266
        %1452 = vmatpush.msra.mxu0 %v1265
        %1453 = vmatpush.msra.mxu0 %v1264
        %1454 = vmatpush.msra.mxu0 %v1263
        %1455 = vmatpush.msra.mxu0 %v1262
        %1456 = vmatpush.msra.mxu0 %v1261
        %1457 = vmatmul.f32.gmra.mxu0 %v1169
        %v1458 = vpop.f32.mrf.mxu0
        %v1459 = vadd.f32 %v1430, %v1458
        %1460 = vmatmul.f32.gmra.mxu0 %v1177
        %v1461 = vpop.f32.mrf.mxu0
        %v1462 = vadd.f32 %v1433, %v1461
        %1463 = vmatmul.f32.gmra.mxu0 %v1185
        %v1464 = vpop.f32.mrf.mxu0
        %v1465 = vadd.f32 %v1436, %v1464
        %1466 = vmatmul.f32.gmra.mxu0 %v1193
        %v1467 = vpop.f32.mrf.mxu0
        %v1468 = vadd.f32 %v1439, %v1467
        %1469 = vdwg.mxu0
        %1470 = vmatpush.msra.mxu0 %v1292
        %1471 = vmatpush.msra.mxu0 %v1291
        %1472 = vmatpush.msra.mxu0 %v1290
        %1473 = vmatpush.msra.mxu0 %v1289
        %1474 = vmatpush.msra.mxu0 %v1288
        %1475 = vmatpush.msra.mxu0 %v1287
        %1476 = vmatpush.msra.mxu0 %v1286
        %1477 = vmatpush.msra.mxu0 %v1285
        %1478 = vmatpush.msra.mxu0 %v1284
        %1479 = vmatpush.msra.mxu0 %v1283
        %1480 = vmatpush.msra.mxu0 %v1282
        %1481 = vmatpush.msra.mxu0 %v1281
        %1482 = vmatpush.msra.mxu0 %v1280
        %1483 = vmatpush.msra.mxu0 %v1279
        %1484 = vmatpush.msra.mxu0 %v1278
        %1485 = vmatpush.msra.mxu0 %v1277
        %1486 = vmatmul.f32.gmra.mxu0 %v1170
        %v1487 = vpop.f32.mrf.mxu0
        %v1488 = vadd.f32 %v1459, %v1487
        %1489 = vmatmul.f32.gmra.mxu0 %v1178
        %v1490 = vpop.f32.mrf.mxu0
        %v1491 = vadd.f32 %v1462, %v1490
        %1492 = vmatmul.f32.gmra.mxu0 %v1186
        %v1493 = vpop.f32.mrf.mxu0
        %v1494 = vadd.f32 %v1465, %v1493
        %1495 = vmatmul.f32.gmra.mxu0 %v1194
        %v1496 = vpop.f32.mrf.mxu0
        %v1497 = vadd.f32 %v1468, %v1496
        %1498 = vdwg.mxu0
        %1499 = vmatpush.msra.mxu0 %v1308
        %1500 = vmatpush.msra.mxu0 %v1307
        %1501 = vmatpush.msra.mxu0 %v1306
        %1502 = vmatpush.msra.mxu0 %v1305
        %1503 = vmatpush.msra.mxu0 %v1304
        %1504 = vmatpush.msra.mxu0 %v1303
        %1505 = vmatpush.msra.mxu0 %v1302
        %1506 = vmatpush.msra.mxu0 %v1301
        %1507 = vmatpush.msra.mxu0 %v1300
        %1508 = vmatpush.msra.mxu0 %v1299
        %1509 = vmatpush.msra.mxu0 %v1298
        %1510 = vmatpush.msra.mxu0 %v1297
        %1511 = vmatpush.msra.mxu0 %v1296
        %1512 = vmatpush.msra.mxu0 %v1295
        %1513 = vmatpush.msra.mxu0 %v1294
        %1514 = vmatpush.msra.mxu0 %v1293
        %1515 = vmatmul.f32.gmra.mxu0 %v1171
        %v1516 = vpop.f32.mrf.mxu0
        %v1517 = vadd.f32 %v1488, %v1516
        %1518 = vmatmul.f32.gmra.mxu0 %v1179
        %v1519 = vpop.f32.mrf.mxu0
        %v1520 = vadd.f32 %v1491, %v1519
        %1521 = vmatmul.f32.gmra.mxu0 %v1187
        %v1522 = vpop.f32.mrf.mxu0
        %v1523 = vadd.f32 %v1494, %v1522
        %1524 = vmatmul.f32.gmra.mxu0 %v1195
        %v1525 = vpop.f32.mrf.mxu0
        %v1526 = vadd.f32 %v1497, %v1525
        %1527 = vdwg.mxu0
        %1528 = vmatpush.msra.mxu0 %v1324
        %1529 = vmatpush.msra.mxu0 %v1323
        %1530 = vmatpush.msra.mxu0 %v1322
        %1531 = vmatpush.msra.mxu0 %v1321
        %1532 = vmatpush.msra.mxu0 %v1320
        %1533 = vmatpush.msra.mxu0 %v1319
        %1534 = vmatpush.msra.mxu0 %v1318
        %1535 = vmatpush.msra.mxu0 %v1317
        %1536 = vmatpush.msra.mxu0 %v1316
        %1537 = vmatpush.msra.mxu0 %v1315
        %1538 = vmatpush.msra.mxu0 %v1314
        %1539 = vmatpush.msra.mxu0 %v1313
        %1540 = vmatpush.msra.mxu0 %v1312
        %1541 = vmatpush.msra.mxu0 %v1311
        %1542 = vmatpush.msra.mxu0 %v1310
        %1543 = vmatpush.msra.mxu0 %v1309
        %1544 = vmatmul.f32.gmra.mxu0 %v1172
        %v1545 = vpop.f32.mrf.mxu0
        %v1546 = vadd.f32 %v1517, %v1545
        %1547 = vmatmul.f32.gmra.mxu0 %v1180
        %v1548 = vpop.f32.mrf.mxu0
        %v1549 = vadd.f32 %v1520, %v1548
        %1550 = vmatmul.f32.gmra.mxu0 %v1188
        %v1551 = vpop.f32.mrf.mxu0
        %v1552 = vadd.f32 %v1523, %v1551
        %1553 = vmatmul.f32.gmra.mxu0 %v1196
        %v1554 = vpop.f32.mrf.mxu0
        %v1555 = vadd.f32 %v1526, %v1554
        %1556 = vdwg.mxu0
        %v1557 = vlaneseq
        %v1558 = vand.u32 %v1557, 127
        %v1559 = vld [vmem:[%s417] sm:$0xff]
        %v1560 = vld [vmem:[%s417 + $0x8] sm:$0xff]
        %v1561 = vld [vmem:[%s417 + $0x10] sm:$0xff]
        %v1562 = vld [vmem:[%s417 + $0x18] sm:$0xff]
        %1563 = vset.pattern.permute.xlu0 0
        %1564 = vperm.xlu0 %1563, %v1559
        %v1565 = vpop.permute.xlu0 %1564
        %1566 = vset.pattern.permute.xlu0 0
        %1567 = vperm.xlu0 %1566, %v1560
        %v1568 = vpop.permute.xlu0 %1567
        %1569 = vset.pattern.permute.xlu0 0
        %1570 = vperm.xlu0 %1569, %v1561
        %v1571 = vpop.permute.xlu0 %1570
        %1572 = vset.pattern.permute.xlu0 0
        %1573 = vperm.xlu0 %1572, %v1562
        %v1574 = vpop.permute.xlu0 %1573
        %vm1575 = vcmp.eq.s32.totalorder %v1565, %v1558
        %vm1576 = vcmp.eq.s32.totalorder %v1568, %v1558
        %vm1577 = vcmp.eq.s32.totalorder %v1571, %v1558
        %vm1578 = vcmp.eq.s32.totalorder %v1574, %v1558
        %v1579 = vsel %vm1575, 1, 0
        %v1580 = vsel %vm1576, 1, 0
        %v1581 = vsel %vm1577, 1, 0
        %v1582 = vsel %vm1578, 1, 0
        %v1583 = vcvt.s32.f32 %v1579
        %v1584 = vcvt.s32.f32 %v1580
        %v1585 = vcvt.s32.f32 %v1581
        %v1586 = vcvt.s32.f32 %v1582
        %v1587 = vld [vmem:[#allocation2] sm:$0xff]
        %v1588 = vld [vmem:[#allocation2 + $0x8] sm:$0xff]
        %v1589 = vld [vmem:[#allocation2 + $0x10] sm:$0xff]
        %v1590 = vld [vmem:[#allocation2 + $0x18] sm:$0xff]
        %1591 = vxpose.xlu0.b32.start [1/16] %v1546, 128
        %1592 = vxpose.xlu0.b32.cont [2/16] %v1549, 128
        %1593 = vxpose.xlu0.b32.cont [3/16] %v1552, 128
        %1594 = vxpose.xlu0.b32.cont [4/16] %v1555, 128
        %1595 = vxpose.xlu0.b32.cont [5/16] 0.0, 128
        %1596 = vxpose.xlu0.b32.cont [6/16] 0.0, 128
        %1597 = vxpose.xlu0.b32.cont [7/16] 0.0, 128
        %1598 = vxpose.xlu0.b32.cont [8/16] 0.0, 128
        %1599 = vxpose.xlu0.b32.cont [9/16] 0.0, 128
        %1600 = vxpose.xlu0.b32.cont [10/16] 0.0, 128
        %1601 = vxpose.xlu0.b32.cont [11/16] 0.0, 128
        %1602 = vxpose.xlu0.b32.cont [12/16] 0.0, 128
        %1603 = vxpose.xlu0.b32.cont [13/16] 0.0, 128
        %1604 = vxpose.xlu0.b32.cont [14/16] 0.0, 128
        %1605 = vxpose.xlu0.b32.cont [15/16] 0.0, 128
        %1606 = vxpose.xlu0.b32.end [16/16] 0.0, 128
        %v1607 = vpop.trf.xlu0
        %v1608 = vpop.trf.xlu0
        %v1609 = vpop.trf.xlu0
        %v1610 = vpop.trf.xlu0
        %v1611 = vpop.trf.xlu0
        %v1612 = vpop.trf.xlu0
        %v1613 = vpop.trf.xlu0
        %v1614 = vpop.trf.xlu0
        %v1615 = vpop.trf.xlu0
        %v1616 = vpop.trf.xlu0
        %v1617 = vpop.trf.xlu0
        %v1618 = vpop.trf.xlu0
        %v1619 = vpop.trf.xlu0
        %v1620 = vpop.trf.xlu0
        %v1621 = vpop.trf.xlu0
        %v1622 = vpop.trf.xlu0
        %v1624 = vsel %vm920, %v1607, 0
        %v1627 = vsel %vm920, %v1608, 0
        %v1630 = vsel %vm920, %v1609, 0
        %v1633 = vsel %vm920, %v1610, 0
        %1635 = vmatpush.msra.mxu0 0.0
        %1636 = vmatpush.msra.mxu0 0.0
        %1637 = vmatpush.msra.mxu0 0.0
        %1638 = vmatpush.msra.mxu0 0.0
        %1639 = vmatpush.msra.mxu0 0.0
        %1640 = vmatpush.msra.mxu0 0.0
        %1641 = vmatpush.msra.mxu0 0.0
        %1642 = vmatpush.msra.mxu0 0.0
        %1643 = vmatpush.msra.mxu0 0.0
        %1644 = vmatpush.msra.mxu0 0.0
        %1645 = vmatpush.msra.mxu0 0.0
        %1646 = vmatpush.msra.mxu0 0.0
        %1647 = vmatpush.msra.mxu0 %v1586
        %1648 = vmatpush.msra.mxu0 %v1585
        %1649 = vmatpush.msra.mxu0 %v1584
        %1650 = vmatpush.msra.mxu0 %v1583
        %1651 = vmatmul.f32.gmra.mxu0 %v1624
        %v1652 = vpop.f32.mrf.mxu0
        %v1653 = vadd.f32 0.0, %v1652
        %1654 = vmatmul.f32.gmra.mxu0 %v1627
        %v1655 = vpop.f32.mrf.mxu0
        %v1656 = vadd.f32 0.0, %v1655
        %1657 = vmatmul.f32.gmra.mxu0 %v1630
        %v1658 = vpop.f32.mrf.mxu0
        %v1659 = vadd.f32 0.0, %v1658
        %1660 = vmatmul.f32.gmra.mxu0 %v1633
        %v1661 = vpop.f32.mrf.mxu0
        %v1662 = vadd.f32 0.0, %v1661
        %1663 = vdwg.mxu0
        %v1664 = vadd.f32 %v1587, %v1653
        %v1665 = vadd.f32 %v1588, %v1656
        %v1666 = vadd.f32 %v1589, %v1659
        %v1667 = vadd.f32 %v1590, %v1662
        %1668 = vst [vmem:[#allocation2] sm:$0xff] %v1664
        %1669 = vst [vmem:[#allocation2 + $0x8] sm:$0xff] %v1665
        %1670 = vst [vmem:[#allocation2 + $0x10] sm:$0xff] %v1666
        %1671 = vst [vmem:[#allocation2 + $0x18] sm:$0xff] %v1667
        // Predicated region
        $region69: #{tpu_custom_call.1} parent=63 // pred_check
          %p1672 = pneg %p282
        $region70: #{tpu_custom_call.1} parent=63 // pred_check_branch
          %1674 = sbr.rel (%p1672) target = $region72
        $region71: #{tpu_custom_call.1} parent=63 // pred_region
          %1676 = vsyncadd [#allocation3], 0
          %s1677 = sshll.u32 [#allocation2], 4
          %s1678 = int_to_ptr.vmem [resolvable:$true] %s1677
          %s1679 = sshll.u32 %s11, 4
          %s1680 = int_to_ptr.hbm [resolvable:$true] %s1679
          %1685 = dma.vmem_to_hbm [thread:$0]  %s1678, 512, %s1680, [#allocation3], 128, 128, 8
        $region72: #{tpu_custom_call.1} parent=63 // pred_fallthru
          _
        // Predicated region
        $region73: #{tpu_custom_call.1} parent=63 // pred_check
          %p1686 = pneg %p282
        $region74: #{tpu_custom_call.1} parent=63 // pred_check_branch
          %1688 = sbr.rel (%p1686) target = $region76
        $region75: #{tpu_custom_call.1} parent=63 // pred_region
          %1690 = dma.done [#allocation3], 512
        $region76: #{tpu_custom_call.1} parent=63 // pred_fallthru
          _
      $region64: #{tpu_custom_call.1} parent=5 // pred_fallthru
        _
      %p1691 = scmp.le.s32.totalorder 2, %s18
      // Predicated region
      $region77: #{tpu_custom_call.1} parent=5 // pred_check
        %p1692 = pneg %p1691
      $region78: #{tpu_custom_call.1} parent=5 // pred_check_branch
        %1694 = sbr.rel (%p1692) target = $region80
      $region79: #{tpu_custom_call.1} parent=5 // pred_region
        %s1695 = ssub.s32 %s18, 2
      $region80: #{tpu_custom_call.1} parent=5 // pred_fallthru
        _
    $region6: #{tpu_custom_call.1} parent=1 // loop_footer
      %s22 = sadd.s32 1, %s18
    $region7: #{tpu_custom_call.1} parent=1 // loop_footer_branch
      %17 = sbr.rel target = $region3
    $region8: #{tpu_custom_call.1} parent=1 // loop_exit
      _
    %1696 = vsyncpa [#allocation3], 1
    %s1697 = scalar_lea.sflag [#allocation3], 1
    %1698 = vsyncpa %s1697, 1

</llo_original>
